<compile_context>
chip_gen: v7x
topology: tpu7x:2x2x1
jax: 0.10.0
libtpu: 0.0.40
codegen_flags: <defaults>
</compile_context>

<pallas_src>
import functools

import jax
import jax.numpy as jnp
from jax.experimental import pallas as pl
from jax.experimental.pallas import tpu as pltpu


# ---------------------------------------------------------------------------
# Model dimensions (x.view(-1, 784) in the PyTorch forward fixes x_dim = 784).
# ---------------------------------------------------------------------------
X_DIM = 784
X_PAD = 896            # 7 * 128: lane-dense padding of the 784-wide dims
H_DIM1 = 128
H_DIM2 = 64
Z_DIM = 16
BATCH = 2


# ---------------------------------------------------------------------------
# Fused VAE forward kernel (one batch tile per grid step; weights resident).
# ---------------------------------------------------------------------------
def vae_kernel(
    x_ref, eps_ref,
    w1_ref, b1_ref, w2_ref, b2_ref, w3_ref, b3_ref,
    w4_ref, b4_ref, w5_ref, b5_ref, w6_ref, b6_ref,
    recon_ref, mulv_ref,
):
    x = x_ref[...]                                            # (TILE_B, 896)

    # ----- encoder -----
    h = jnp.dot(x, w1_ref[...], preferred_element_type=jnp.float32) + b1_ref[...]
    h = jnp.maximum(h, 0.0)                                   # relu(fc1)
    h = jnp.dot(h, w2_ref[...], preferred_element_type=jnp.float32) + b2_ref[...]
    h = jnp.maximum(h, 0.0)                                   # relu(fc2)

    # fused latent heads: [fc31 | fc32] -> (TILE_B, 2*Z_DIM)
    mulv = jnp.dot(h, w3_ref[...], preferred_element_type=jnp.float32) + b3_ref[...]
    mulv_ref[...] = mulv                                      # lane-dense (B, 32) store
    mu = mulv[:, :Z_DIM]
    log_var = mulv[:, Z_DIM:]

    # ----- sampling: z = eps * exp(0.5 * log_var) + mu -----
    z = eps_ref[...] * jnp.exp(0.5 * log_var) + mu

    # ----- decoder -----
    d = jnp.dot(z, w4_ref[...], preferred_element_type=jnp.float32) + b4_ref[...]
    d = jnp.maximum(d, 0.0)                                   # relu(fc4)
    d = jnp.dot(d, w5_ref[...], preferred_element_type=jnp.float32) + b5_ref[...]
    d = jnp.maximum(d, 0.0)                                   # relu(fc5)
    logits = jnp.dot(d, w6_ref[...], preferred_element_type=jnp.float32) + b6_ref[...]

    recon_ref[...] = jax.nn.sigmoid(logits)                   # sigmoid(fc6)


# ---------------------------------------------------------------------------
# Parameter init (deterministic, PyTorch-Linear-style uniform(+-1/sqrt(fan_in))).
# Weights are stored already transposed to (in, out); biases as (1, out).
# ---------------------------------------------------------------------------
def init_linear(key, fan_in, fan_out):
    kw, kb = jax.random.split(key)
    bound = 1.0 / jnp.sqrt(jnp.float32(fan_in))
    w = jax.random.uniform(kw, (fan_in, fan_out), jnp.float32, -bound, bound)
    b = jax.random.uniform(kb, (1, fan_out), jnp.float32, -bound, bound)
    return w, b


def init_params(key):
    keys = jax.random.split(key, 7)
    return {
        "fc1": init_linear(keys[0], X_DIM, H_DIM1),
        "fc2": init_linear(keys[1], H_DIM1, H_DIM2),
        "fc31": init_linear(keys[2], H_DIM2, Z_DIM),
        "fc32": init_linear(keys[3], H_DIM2, Z_DIM),
        "fc4": init_linear(keys[4], Z_DIM, H_DIM2),
        "fc5": init_linear(keys[5], H_DIM2, H_DIM1),
        "fc6": init_linear(keys[6], H_DIM1, X_DIM),
    }


def _prepare_weights(params):
    """Fuse fc31/fc32 and zero-pad the 784-wide dims to 896; return flat list."""
    w1, b1 = params["fc1"]
    w2, b2 = params["fc2"]
    w31, b31 = params["fc31"]
    w32, b32 = params["fc32"]
    w4, b4 = params["fc4"]
    w5, b5 = params["fc5"]
    w6, b6 = params["fc6"]

    w1p = jnp.zeros((X_PAD, H_DIM1), jnp.float32).at[:X_DIM, :].set(w1)
    w3 = jnp.concatenate([w31, w32], axis=1)                  # (H2, 2*Z)
    b3 = jnp.concatenate([b31, b32], axis=1)                  # (1, 2*Z)
    w6p = jnp.zeros((H_DIM1, X_PAD), jnp.float32).at[:, :X_DIM].set(w6)
    b6p = jnp.zeros((1, X_PAD), jnp.float32).at[:, :X_DIM].set(b6)

    return [w1p, b1, w2, b2, w3, b3, w4, b4, w5, b5, w6p, b6p]


def _tile_b(batch):
    """Batch-tile size: MXU-friendly for large batches, full (8-aligned) batch
    when small. 256 fills the 256-wide MXU rows on v6e/v7x; v5e's 128-wide MXU
    is simply fed twice per tile."""
    if batch >= 512:
        return 512
    if batch >= 256:
        return 256
    return max(8, ((batch + 7) // 8) * 8)


# ---------------------------------------------------------------------------
# Wrapper: flatten + pad input, tile the batch over a 1-D grid, weights resident.
# ---------------------------------------------------------------------------
@jax.jit
def vae_forward(x, eps, params):
    x2d = x.reshape(-1, X_DIM).astype(jnp.float32)            # x.view(-1, 784)
    batch = x2d.shape[0]

    tile_b = _tile_b(batch)
    b_pad = ((batch + tile_b - 1) // tile_b) * tile_b
    n_tiles = b_pad // tile_b

    # Lane-dense, tile-aligned activations (zero padding is sliced off below).
    x_pad = jnp.zeros((b_pad, X_PAD), jnp.float32).at[:batch, :X_DIM].set(x2d)
    eps_pad = jnp.zeros((b_pad, Z_DIM), jnp.float32).at[:batch, :].set(
        eps.astype(jnp.float32))

    flat = _prepare_weights(params)

    # x / eps stream per batch tile; weights use a constant index_map so they are
    # DMA'd into VMEM once and stay resident across all grid steps.
    def const_spec(a):
        return pl.BlockSpec(a.shape, lambda i: (0, 0))

    in_specs = [
        pl.BlockSpec((tile_b, X_PAD), lambda i: (i, 0)),
        pl.BlockSpec((tile_b, Z_DIM), lambda i: (i, 0)),
    ] + [const_spec(a) for a in flat]

    out_specs = (
        pl.BlockSpec((tile_b, X_PAD), lambda i: (i, 0)),
        pl.BlockSpec((tile_b, 2 * Z_DIM), lambda i: (i, 0)),
    )

    flops = 2 * b_pad * (
        X_PAD * H_DIM1 + H_DIM1 * H_DIM2 + H_DIM2 * (2 * Z_DIM)
        + Z_DIM * H_DIM2 + H_DIM2 * H_DIM1 + H_DIM1 * X_PAD)
    transcendentals = b_pad * (X_PAD + Z_DIM)                 # sigmoid + exp(0.5*lv)
    weight_bytes = sum(int(a.size) * a.dtype.itemsize for a in flat)
    bytes_accessed = weight_bytes + 4 * b_pad * (2 * X_PAD + 3 * Z_DIM)

    recon_pad, mulv = pl.pallas_call(
        vae_kernel,
        out_shape=(
            jax.ShapeDtypeStruct((b_pad, X_PAD), jnp.float32),
            jax.ShapeDtypeStruct((b_pad, 2 * Z_DIM), jnp.float32),
        ),
        grid_spec=pltpu.PrefetchScalarGridSpec(
            num_scalar_prefetch=0,
            grid=(n_tiles,),
            in_specs=in_specs,
            out_specs=out_specs,
        ),
        compiler_params=pltpu.CompilerParams(
            dimension_semantics=("parallel",)),
        cost_estimate=pl.CostEstimate(
            flops=flops,
            transcendentals=transcendentals,
            bytes_accessed=bytes_accessed),
    )(x_pad, eps_pad, *flat)

    # Slice off batch/lane padding (padded recon lanes are sigmoid(0)=0.5, dropped).
    recon = recon_pad[:batch, :X_DIM]
    mu = mulv[:batch, :Z_DIM]
    log_var = mulv[:batch, Z_DIM:]
    return recon, mu, log_var


# ---------------------------------------------------------------------------
# Pure-JAX reference (unfused, unpadded) for a sanity check of the kernel math.
# ---------------------------------------------------------------------------
def vae_forward_ref(x, eps, params):
    x2d = x.reshape(-1, X_DIM).astype(jnp.float32)
    relu = lambda v: jnp.maximum(v, 0.0)
    lin = lambda v, p: v @ p[0] + p[1]
    h = relu(lin(x2d, params["fc1"]))
    h = relu(lin(h, params["fc2"]))
    mu = lin(h, params["fc31"])
    log_var = lin(h, params["fc32"])
    z = eps * jnp.exp(0.5 * log_var) + mu
    d = relu(lin(z, params["fc4"]))
    d = relu(lin(d, params["fc5"]))
    recon = jax.nn.sigmoid(lin(d, params["fc6"]))
    return recon, mu, log_var


if __name__ == "__main__":
    key = jax.random.PRNGKey(0)
    k_params, k_x, k_eps, k_x2, k_eps2 = jax.random.split(key, 5)

    params = init_params(k_params)

    # --- main case: PyTorch-style NCHW MNIST-like input at batch=2 ---
    x = jax.random.uniform(k_x, (BATCH, 1, 28, 28), jnp.float32)
    # torch.randn_like(std) equivalent: standard normal noise for sampling.
    eps = jax.random.normal(k_eps, (BATCH, Z_DIM), jnp.float32)

    recon, mu, log_var = vae_forward(x, eps, params)
    jax.block_until_ready((recon, mu, log_var))

    r_ref, mu_ref, lv_ref = vae_forward_ref(x, eps, params)
    assert recon.shape == (BATCH, X_DIM)
    assert mu.shape == (BATCH, Z_DIM) and log_var.shape == (BATCH, Z_DIM)
    assert jnp.allclose(recon, r_ref, atol=2e-5, rtol=2e-5)
    assert jnp.allclose(mu, mu_ref, atol=2e-5, rtol=2e-5)
    assert jnp.allclose(log_var, lv_ref, atol=2e-5, rtol=2e-5)

    # --- secondary case: larger batch to exercise the multi-tile grid path ---
    B2 = 300
    x2 = jax.random.uniform(k_x2, (B2, 1, 28, 28), jnp.float32)
    eps2 = jax.random.normal(k_eps2, (B2, Z_DIM), jnp.float32)
    r2, mu2, lv2 = vae_forward(x2, eps2, params)
    jax.block_until_ready((r2, mu2, lv2))
    r2_ref, mu2_ref, lv2_ref = vae_forward_ref(x2, eps2, params)
    assert jnp.allclose(r2, r2_ref, atol=2e-5, rtol=2e-5)
    assert jnp.allclose(mu2, mu2_ref, atol=2e-5, rtol=2e-5)
    assert jnp.allclose(lv2, lv2_ref, atol=2e-5, rtol=2e-5)

    # TODO(synk): optional in-kernel eps via pltpu.prng_seed/stateful_normal to
    # drop the eps input DMA; kept as an explicit input for deterministic testing.
    print("KERNEL_OK")
</pallas_src>

<mosaic_0001>
module attributes {stable_mosaic.version = 11 : i64} {
  func.func @vae_kernel(%arg0: i32, %arg1: memref<8x896xf32, #tpu.memory_space<vmem>>, %arg2: memref<8x16xf32, #tpu.memory_space<vmem>>, %arg3: memref<896x128xf32, #tpu.memory_space<vmem>>, %arg4: memref<1x128xf32, #tpu.memory_space<vmem>>, %arg5: memref<128x64xf32, #tpu.memory_space<vmem>>, %arg6: memref<1x64xf32, #tpu.memory_space<vmem>>, %arg7: memref<64x32xf32, #tpu.memory_space<vmem>>, %arg8: memref<1x32xf32, #tpu.memory_space<vmem>>, %arg9: memref<16x64xf32, #tpu.memory_space<vmem>>, %arg10: memref<1x64xf32, #tpu.memory_space<vmem>>, %arg11: memref<64x128xf32, #tpu.memory_space<vmem>>, %arg12: memref<1x128xf32, #tpu.memory_space<vmem>>, %arg13: memref<128x896xf32, #tpu.memory_space<vmem>>, %arg14: memref<1x896xf32, #tpu.memory_space<vmem>>, %arg15: memref<8x896xf32, #tpu.memory_space<vmem>>, %arg16: memref<8x32xf32, #tpu.memory_space<vmem>>) attributes {dimension_semantics = [#tpu.dimension_semantics<parallel>], iteration_bounds = array<i64: 1>, scalar_prefetch = 0 : i64, scratch_operands = 0 : i64, tpu.core_type = #tpu.core_type<tc>, window_params = [{transform_indices = @transform_0, window_bounds = array<i64: 8, 896>}, {transform_indices = @transform_1, window_bounds = array<i64: 8, 16>}, {pipeline_mode = #tpu.pipeline_mode<synchronous>, transform_indices = @transform_2, window_bounds = array<i64: 896, 128>}, {pipeline_mode = #tpu.pipeline_mode<synchronous>, transform_indices = @transform_3, window_bounds = array<i64: 1, 128>}, {pipeline_mode = #tpu.pipeline_mode<synchronous>, transform_indices = @transform_4, window_bounds = array<i64: 128, 64>}, {pipeline_mode = #tpu.pipeline_mode<synchronous>, transform_indices = @transform_5, window_bounds = array<i64: 1, 64>}, {pipeline_mode = #tpu.pipeline_mode<synchronous>, transform_indices = @transform_6, window_bounds = array<i64: 64, 32>}, {pipeline_mode = #tpu.pipeline_mode<synchronous>, transform_indices = @transform_7, window_bounds = array<i64: 1, 32>}, {pipeline_mode = #tpu.pipeline_mode<synchronous>, transform_indices = @transform_8, window_bounds = array<i64: 16, 64>}, {pipeline_mode = #tpu.pipeline_mode<synchronous>, transform_indices = @transform_9, window_bounds = array<i64: 1, 64>}, {pipeline_mode = #tpu.pipeline_mode<synchronous>, transform_indices = @transform_10, window_bounds = array<i64: 64, 128>}, {pipeline_mode = #tpu.pipeline_mode<synchronous>, transform_indices = @transform_11, window_bounds = array<i64: 1, 128>}, {pipeline_mode = #tpu.pipeline_mode<synchronous>, transform_indices = @transform_12, window_bounds = array<i64: 128, 896>}, {pipeline_mode = #tpu.pipeline_mode<synchronous>, transform_indices = @transform_13, window_bounds = array<i64: 1, 896>}, {transform_indices = @transform_14, window_bounds = array<i64: 8, 896>}, {transform_indices = @transform_15, window_bounds = array<i64: 8, 32>}]} {
    %c0 = arith.constant 0 : index
    %c0_0 = arith.constant 0 : index
    %0 = vector.load %arg1[%c0, %c0_0] : memref<8x896xf32, #tpu.memory_space<vmem>>, vector<8x896xf32>
    %c0_1 = arith.constant 0 : index
    %c0_2 = arith.constant 0 : index
    %1 = vector.load %arg3[%c0_1, %c0_2] : memref<896x128xf32, #tpu.memory_space<vmem>>, vector<896x128xf32>
    %cst = arith.constant dense<0.000000e+00> : vector<8x128xf32>
    %2 = tpu.matmul %0, %1, %cst {dimension_numbers = #tpu.dot_dimension_numbers<[1], [0], [0], [1], [0, 0, 1, 1], [], []>} : vector<8x896xf32>, vector<896x128xf32>, vector<8x128xf32> -> vector<8x128xf32>
    %c0_3 = arith.constant 0 : index
    %c0_4 = arith.constant 0 : index
    %3 = vector.load %arg4[%c0_3, %c0_4] : memref<1x128xf32, #tpu.memory_space<vmem>>, vector<1x128xf32>
    %4 = vector.broadcast %3 : vector<1x128xf32> to vector<8x128xf32>
    %5 = arith.addf %2, %4 : vector<8x128xf32>
    %cst_5 = arith.constant 0.000000e+00 : f32
    %6 = vector.broadcast %cst_5 : f32 to vector<8x128xf32>
    %7 = arith.maximumf %5, %6 : vector<8x128xf32>
    %c0_6 = arith.constant 0 : index
    %c0_7 = arith.constant 0 : index
    %8 = vector.load %arg5[%c0_6, %c0_7] : memref<128x64xf32, #tpu.memory_space<vmem>>, vector<128x64xf32>
    %cst_8 = arith.constant dense<0.000000e+00> : vector<8x64xf32>
    %9 = tpu.matmul %7, %8, %cst_8 {dimension_numbers = #tpu.dot_dimension_numbers<[1], [0], [0], [1], [0, 0, 1, 1], [], []>} : vector<8x128xf32>, vector<128x64xf32>, vector<8x64xf32> -> vector<8x64xf32>
    %c0_9 = arith.constant 0 : index
    %c0_10 = arith.constant 0 : index
    %10 = vector.load %arg6[%c0_9, %c0_10] : memref<1x64xf32, #tpu.memory_space<vmem>>, vector<1x64xf32>
    %11 = vector.broadcast %10 : vector<1x64xf32> to vector<8x64xf32>
    %12 = arith.addf %9, %11 : vector<8x64xf32>
    %cst_11 = arith.constant 0.000000e+00 : f32
    %13 = vector.broadcast %cst_11 : f32 to vector<8x64xf32>
    %14 = arith.maximumf %12, %13 : vector<8x64xf32>
    %c0_12 = arith.constant 0 : index
    %c0_13 = arith.constant 0 : index
    %15 = vector.load %arg7[%c0_12, %c0_13] : memref<64x32xf32, #tpu.memory_space<vmem>>, vector<64x32xf32>
    %cst_14 = arith.constant dense<0.000000e+00> : vector<8x32xf32>
    %16 = tpu.matmul %14, %15, %cst_14 {dimension_numbers = #tpu.dot_dimension_numbers<[1], [0], [0], [1], [0, 0, 1, 1], [], []>} : vector<8x64xf32>, vector<64x32xf32>, vector<8x32xf32> -> vector<8x32xf32>
    %c0_15 = arith.constant 0 : index
    %c0_16 = arith.constant 0 : index
    %17 = vector.load %arg8[%c0_15, %c0_16] : memref<1x32xf32, #tpu.memory_space<vmem>>, vector<1x32xf32>
    %18 = vector.broadcast %17 : vector<1x32xf32> to vector<8x32xf32>
    %19 = arith.addf %16, %18 : vector<8x32xf32>
    %c0_17 = arith.constant 0 : index
    %c0_18 = arith.constant 0 : index
    %20 = vector.load %arg16[%c0_17, %c0_18] : memref<8x32xf32, #tpu.memory_space<vmem>>, vector<8x32xf32>
    tpu.vector_store %arg16[%c0_17, %c0_18], %19 {strides = array<i32>} : memref<8x32xf32, #tpu.memory_space<vmem>>, vector<8x32xf32>,
    %21 = vector.extract_strided_slice %19 {offsets = [0, 0], sizes = [8, 16], strides = [1, 1]} : vector<8x32xf32> to vector<8x16xf32>
    %22 = vector.extract_strided_slice %19 {offsets = [0, 16], sizes = [8, 16], strides = [1, 1]} : vector<8x32xf32> to vector<8x16xf32>
    %c0_19 = arith.constant 0 : index
    %c0_20 = arith.constant 0 : index
    %23 = vector.load %arg2[%c0_19, %c0_20] : memref<8x16xf32, #tpu.memory_space<vmem>>, vector<8x16xf32>
    %cst_21 = arith.constant 5.000000e-01 : f32
    %24 = vector.broadcast %cst_21 : f32 to vector<8x16xf32>
    %25 = arith.mulf %24, %22 : vector<8x16xf32>
    %26 = math.exp %25 : vector<8x16xf32>
    %27 = arith.mulf %23, %26 : vector<8x16xf32>
    %28 = arith.addf %27, %21 : vector<8x16xf32>
    %c0_22 = arith.constant 0 : index
    %c0_23 = arith.constant 0 : index
    %29 = vector.load %arg9[%c0_22, %c0_23] : memref<16x64xf32, #tpu.memory_space<vmem>>, vector<16x64xf32>
    %cst_24 = arith.constant dense<0.000000e+00> : vector<8x64xf32>
    %30 = tpu.matmul %28, %29, %cst_24 {dimension_numbers = #tpu.dot_dimension_numbers<[1], [0], [0], [1], [0, 0, 1, 1], [], []>} : vector<8x16xf32>, vector<16x64xf32>, vector<8x64xf32> -> vector<8x64xf32>
    %c0_25 = arith.constant 0 : index
    %c0_26 = arith.constant 0 : index
    %31 = vector.load %arg10[%c0_25, %c0_26] : memref<1x64xf32, #tpu.memory_space<vmem>>, vector<1x64xf32>
    %32 = vector.broadcast %31 : vector<1x64xf32> to vector<8x64xf32>
    %33 = arith.addf %30, %32 : vector<8x64xf32>
    %cst_27 = arith.constant 0.000000e+00 : f32
    %34 = vector.broadcast %cst_27 : f32 to vector<8x64xf32>
    %35 = arith.maximumf %33, %34 : vector<8x64xf32>
    %c0_28 = arith.constant 0 : index
    %c0_29 = arith.constant 0 : index
    %36 = vector.load %arg11[%c0_28, %c0_29] : memref<64x128xf32, #tpu.memory_space<vmem>>, vector<64x128xf32>
    %cst_30 = arith.constant dense<0.000000e+00> : vector<8x128xf32>
    %37 = tpu.matmul %35, %36, %cst_30 {dimension_numbers = #tpu.dot_dimension_numbers<[1], [0], [0], [1], [0, 0, 1, 1], [], []>} : vector<8x64xf32>, vector<64x128xf32>, vector<8x128xf32> -> vector<8x128xf32>
    %c0_31 = arith.constant 0 : index
    %c0_32 = arith.constant 0 : index
    %38 = vector.load %arg12[%c0_31, %c0_32] : memref<1x128xf32, #tpu.memory_space<vmem>>, vector<1x128xf32>
    %39 = vector.broadcast %38 : vector<1x128xf32> to vector<8x128xf32>
    %40 = arith.addf %37, %39 : vector<8x128xf32>
    %cst_33 = arith.constant 0.000000e+00 : f32
    %41 = vector.broadcast %cst_33 : f32 to vector<8x128xf32>
    %42 = arith.maximumf %40, %41 : vector<8x128xf32>
    %c0_34 = arith.constant 0 : index
    %c0_35 = arith.constant 0 : index
    %43 = vector.load %arg13[%c0_34, %c0_35] : memref<128x896xf32, #tpu.memory_space<vmem>>, vector<128x896xf32>
    %cst_36 = arith.constant dense<0.000000e+00> : vector<8x896xf32>
    %44 = tpu.matmul %42, %43, %cst_36 {dimension_numbers = #tpu.dot_dimension_numbers<[1], [0], [0], [1], [0, 0, 1, 1], [], []>} : vector<8x128xf32>, vector<128x896xf32>, vector<8x896xf32> -> vector<8x896xf32>
    %c0_37 = arith.constant 0 : index
    %c0_38 = arith.constant 0 : index
    %45 = vector.load %arg14[%c0_37, %c0_38] : memref<1x896xf32, #tpu.memory_space<vmem>>, vector<1x896xf32>
    %46 = vector.broadcast %45 : vector<1x896xf32> to vector<8x896xf32>
    %47 = arith.addf %44, %46 : vector<8x896xf32>
    %48 = arith.negf %47 : vector<8x896xf32>
    %49 = math.exp %48 : vector<8x896xf32>
    %cst_39 = arith.constant 1.000000e+00 : f32
    %50 = vector.broadcast %cst_39 : f32 to vector<8x896xf32>
    %51 = arith.addf %50, %49 : vector<8x896xf32>
    %52 = arith.divf %50, %51 : vector<8x896xf32>
    %c0_40 = arith.constant 0 : index
    %c0_41 = arith.constant 0 : index
    %53 = vector.load %arg15[%c0_40, %c0_41] : memref<8x896xf32, #tpu.memory_space<vmem>>, vector<8x896xf32>
    tpu.vector_store %arg15[%c0_40, %c0_41], %52 {strides = array<i32>} : memref<8x896xf32, #tpu.memory_space<vmem>>, vector<8x896xf32>,
    return
  }
  func.func @transform_0(%arg0: i32) -> (i32, i32) {
    %c0_i32 = arith.constant 0 : i32
    %c0_i32_0 = arith.constant 0 : i32
    return %arg0, %c0_i32 : i32, i32
  }
  func.func @transform_1(%arg0: i32) -> (i32, i32) {
    %c0_i32 = arith.constant 0 : i32
    %c0_i32_0 = arith.constant 0 : i32
    return %arg0, %c0_i32 : i32, i32
  }
  func.func @transform_2(%arg0: i32) -> (i32, i32) {
    %c0_i32 = arith.constant 0 : i32
    %c0_i32_0 = arith.constant 0 : i32
    %c0_i32_1 = arith.constant 0 : i32
    return %c0_i32, %c0_i32_0 : i32, i32
  }
  func.func @transform_3(%arg0: i32) -> (i32, i32) {
    %c0_i32 = arith.constant 0 : i32
    %c0_i32_0 = arith.constant 0 : i32
    %c0_i32_1 = arith.constant 0 : i32
    return %c0_i32, %c0_i32_0 : i32, i32
  }
  func.func @transform_4(%arg0: i32) -> (i32, i32) {
    %c0_i32 = arith.constant 0 : i32
    %c0_i32_0 = arith.constant 0 : i32
    %c0_i32_1 = arith.constant 0 : i32
    return %c0_i32, %c0_i32_0 : i32, i32
  }
  func.func @transform_5(%arg0: i32) -> (i32, i32) {
    %c0_i32 = arith.constant 0 : i32
    %c0_i32_0 = arith.constant 0 : i32
    %c0_i32_1 = arith.constant 0 : i32
    return %c0_i32, %c0_i32_0 : i32, i32
  }
  func.func @transform_6(%arg0: i32) -> (i32, i32) {
    %c0_i32 = arith.constant 0 : i32
    %c0_i32_0 = arith.constant 0 : i32
    %c0_i32_1 = arith.constant 0 : i32
    return %c0_i32, %c0_i32_0 : i32, i32
  }
  func.func @transform_7(%arg0: i32) -> (i32, i32) {
    %c0_i32 = arith.constant 0 : i32
    %c0_i32_0 = arith.constant 0 : i32
    %c0_i32_1 = arith.constant 0 : i32
    return %c0_i32, %c0_i32_0 : i32, i32
  }
  func.func @transform_8(%arg0: i32) -> (i32, i32) {
    %c0_i32 = arith.constant 0 : i32
    %c0_i32_0 = arith.constant 0 : i32
    %c0_i32_1 = arith.constant 0 : i32
    return %c0_i32, %c0_i32_0 : i32, i32
  }
  func.func @transform_9(%arg0: i32) -> (i32, i32) {
    %c0_i32 = arith.constant 0 : i32
    %c0_i32_0 = arith.constant 0 : i32
    %c0_i32_1 = arith.constant 0 : i32
    return %c0_i32, %c0_i32_0 : i32, i32
  }
  func.func @transform_10(%arg0: i32) -> (i32, i32) {
    %c0_i32 = arith.constant 0 : i32
    %c0_i32_0 = arith.constant 0 : i32
    %c0_i32_1 = arith.constant 0 : i32
    return %c0_i32, %c0_i32_0 : i32, i32
  }
  func.func @transform_11(%arg0: i32) -> (i32, i32) {
    %c0_i32 = arith.constant 0 : i32
    %c0_i32_0 = arith.constant 0 : i32
    %c0_i32_1 = arith.constant 0 : i32
    return %c0_i32, %c0_i32_0 : i32, i32
  }
  func.func @transform_12(%arg0: i32) -> (i32, i32) {
    %c0_i32 = arith.constant 0 : i32
    %c0_i32_0 = arith.constant 0 : i32
    %c0_i32_1 = arith.constant 0 : i32
    return %c0_i32, %c0_i32_0 : i32, i32
  }
  func.func @transform_13(%arg0: i32) -> (i32, i32) {
    %c0_i32 = arith.constant 0 : i32
    %c0_i32_0 = arith.constant 0 : i32
    %c0_i32_1 = arith.constant 0 : i32
    return %c0_i32, %c0_i32_0 : i32, i32
  }
  func.func @transform_14(%arg0: i32) -> (i32, i32) {
    %c0_i32 = arith.constant 0 : i32
    %c0_i32_0 = arith.constant 0 : i32
    return %arg0, %c0_i32 : i32, i32
  }
  func.func @transform_15(%arg0: i32) -> (i32, i32) {
    %c0_i32 = arith.constant 0 : i32
    %c0_i32_0 = arith.constant 0 : i32
    return %arg0, %c0_i32 : i32, i32
  }
}

</mosaic_0001>

<llo_original>
// kernel: vae_forward.1
$region0: #{vae_forward.1}
  #allocation0 [shape = 'u32[]', space=smem, size = 0x4, offset = 0x4, fixed_abs, tag = 'smem constant byte address 0x4 - core index']
  #allocation1 [shape = 'u32[144,128]{1,0:T(1,128)}', space=vmem, size = 0x12000, scoped, tag = 'internal scratch']
  %s0 = inlined_call_operand.vmem [shape: f32[8,896], index: 0, kind: input, shape index: {}]
  %s1 = inlined_call_operand.vmem [shape: f32[8,16], index: 1, kind: input, shape index: {}]
  %s2 = inlined_call_operand.vmem [shape: f32[896,128], index: 2, kind: input, shape index: {}]
  %s3 = inlined_call_operand.vmem [shape: f32[1,128], index: 3, kind: input, shape index: {}]
  %s4 = inlined_call_operand.vmem [shape: f32[128,64], index: 4, kind: input, shape index: {}]
  %s5 = inlined_call_operand.vmem [shape: f32[1,64], index: 5, kind: input, shape index: {}]
  %s6 = inlined_call_operand.vmem [shape: f32[64,32], index: 6, kind: input, shape index: {}]
  %s7 = inlined_call_operand.vmem [shape: f32[1,32], index: 7, kind: input, shape index: {}]
  %s8 = inlined_call_operand.vmem [shape: f32[16,64], index: 8, kind: input, shape index: {}]
  %s9 = inlined_call_operand.vmem [shape: f32[1,64], index: 9, kind: input, shape index: {}]
  %s10 = inlined_call_operand.vmem [shape: f32[64,128], index: 10, kind: input, shape index: {}]
  %s11 = inlined_call_operand.vmem [shape: f32[1,128], index: 11, kind: input, shape index: {}]
  %s12 = inlined_call_operand.vmem [shape: f32[128,896], index: 12, kind: input, shape index: {}]
  %s13 = inlined_call_operand.vmem [shape: f32[1,896], index: 13, kind: input, shape index: {}]
  %s14 = inlined_call_operand.vmem [shape: f32[8,896], index: 14, kind: output, shape index: {0}]
  %s15 = inlined_call_operand.vmem [shape: f32[8,32], index: 15, kind: output, shape index: {1}]
  %16 = xla_tuple %s14, %s15
  %s17 = sld [smem:[#allocation0]]
  $region74: #{vae_forward.1} parent=0
    _
  %s19 = ssub.s32 1, %s17
  %s20 = scalar_select 0, %s19, %s17
  // Predicated region
  $region2: #{vae_forward.1} parent=0 // pred_check
    _
  $region3: #{vae_forward.1} parent=0 // pred_check_branch
    %22 = sbr.rel (0) target = $region5
  $region4: #{vae_forward.1} parent=0 // pred_region
    _
  $region5: #{vae_forward.1} parent=0 // pred_fallthru
    _
  // Predicated region
  $region6: #{vae_forward.1} parent=0 // pred_check
    _
  $region7: #{vae_forward.1} parent=0 // pred_check_branch
    %24 = sbr.rel (0) target = $region9
  $region8: #{vae_forward.1} parent=0 // pred_region
    _
  $region9: #{vae_forward.1} parent=0 // pred_fallthru
    _
  // Predicated region
  $region10: #{vae_forward.1} parent=0 // pred_check
    _
  $region11: #{vae_forward.1} parent=0 // pred_check_branch
    %26 = sbr.rel (0) target = $region13
  $region12: #{vae_forward.1} parent=0 // pred_region
    _
  $region13: #{vae_forward.1} parent=0 // pred_fallthru
    _
  // Predicated region
  $region14: #{vae_forward.1} parent=0 // pred_check
    _
  $region15: #{vae_forward.1} parent=0 // pred_check_branch
    %28 = sbr.rel (0) target = $region17
  $region16: #{vae_forward.1} parent=0 // pred_region
    _
  $region17: #{vae_forward.1} parent=0 // pred_fallthru
    _
  // Predicated region
  $region18: #{vae_forward.1} parent=0 // pred_check
    _
  $region19: #{vae_forward.1} parent=0 // pred_check_branch
    %30 = sbr.rel (0) target = $region21
  $region20: #{vae_forward.1} parent=0 // pred_region
    _
  $region21: #{vae_forward.1} parent=0 // pred_fallthru
    _
  // Predicated region
  $region22: #{vae_forward.1} parent=0 // pred_check
    _
  $region23: #{vae_forward.1} parent=0 // pred_check_branch
    %32 = sbr.rel (0) target = $region25
  $region24: #{vae_forward.1} parent=0 // pred_region
    _
  $region25: #{vae_forward.1} parent=0 // pred_fallthru
    _
  // Predicated region
  $region26: #{vae_forward.1} parent=0 // pred_check
    _
  $region27: #{vae_forward.1} parent=0 // pred_check_branch
    %34 = sbr.rel (0) target = $region29
  $region28: #{vae_forward.1} parent=0 // pred_region
    _
  $region29: #{vae_forward.1} parent=0 // pred_fallthru
    _
  // Predicated region
  $region30: #{vae_forward.1} parent=0 // pred_check
    _
  $region31: #{vae_forward.1} parent=0 // pred_check_branch
    %36 = sbr.rel (0) target = $region33
  $region32: #{vae_forward.1} parent=0 // pred_region
    _
  $region33: #{vae_forward.1} parent=0 // pred_fallthru
    _
  // Predicated region
  $region34: #{vae_forward.1} parent=0 // pred_check
    _
  $region35: #{vae_forward.1} parent=0 // pred_check_branch
    %38 = sbr.rel (0) target = $region37
  $region36: #{vae_forward.1} parent=0 // pred_region
    _
  $region37: #{vae_forward.1} parent=0 // pred_fallthru
    _
  // Predicated region
  $region38: #{vae_forward.1} parent=0 // pred_check
    _
  $region39: #{vae_forward.1} parent=0 // pred_check_branch
    %40 = sbr.rel (0) target = $region41
  $region40: #{vae_forward.1} parent=0 // pred_region
    _
  $region41: #{vae_forward.1} parent=0 // pred_fallthru
    _
  // Predicated region
  $region42: #{vae_forward.1} parent=0 // pred_check
    _
  $region43: #{vae_forward.1} parent=0 // pred_check_branch
    %42 = sbr.rel (0) target = $region45
  $region44: #{vae_forward.1} parent=0 // pred_region
    _
  $region45: #{vae_forward.1} parent=0 // pred_fallthru
    _
  // Predicated region
  $region46: #{vae_forward.1} parent=0 // pred_check
    _
  $region47: #{vae_forward.1} parent=0 // pred_check_branch
    %44 = sbr.rel (0) target = $region49
  $region48: #{vae_forward.1} parent=0 // pred_region
    _
  $region49: #{vae_forward.1} parent=0 // pred_fallthru
    _
  // Predicated region
  $region50: #{vae_forward.1} parent=0 // pred_check
    _
  $region51: #{vae_forward.1} parent=0 // pred_check_branch
    %46 = sbr.rel (0) target = $region53
  $region52: #{vae_forward.1} parent=0 // pred_region
    _
  $region53: #{vae_forward.1} parent=0 // pred_fallthru
    _
  // Predicated region
  $region54: #{vae_forward.1} parent=0 // pred_check
    _
  $region55: #{vae_forward.1} parent=0 // pred_check_branch
    %48 = sbr.rel (0) target = $region57
  $region56: #{vae_forward.1} parent=0 // pred_region
    _
  $region57: #{vae_forward.1} parent=0 // pred_fallthru
    _
  %v49 = vld [vmem:[%s0] sm:$0xff]
  %v50 = vld [vmem:[%s0 + $0x8] sm:$0xff]
  %v51 = vld [vmem:[%s0 + $0x10] sm:$0xff]
  %v52 = vld [vmem:[%s0 + $0x18] sm:$0xff]
  %v53 = vld [vmem:[%s0 + $0x20] sm:$0xff]
  %v54 = vld [vmem:[%s0 + $0x28] sm:$0xff]
  %v55 = vld [vmem:[%s0 + $0x30] sm:$0xff]
  %v56 = vld [vmem:[%s2] sm:$0xff]
  %v57 = vld [vmem:[%s2 + $0x8] sm:$0xff]
  %v58 = vld [vmem:[%s2 + $0x10] sm:$0xff]
  %v59 = vld [vmem:[%s2 + $0x18] sm:$0xff]
  %v60 = vld [vmem:[%s2 + $0x20] sm:$0xff]
  %v61 = vld [vmem:[%s2 + $0x28] sm:$0xff]
  %v62 = vld [vmem:[%s2 + $0x30] sm:$0xff]
  %v63 = vld [vmem:[%s2 + $0x38] sm:$0xff]
  %v64 = vld [vmem:[%s2 + $0x40] sm:$0xff]
  %v65 = vld [vmem:[%s2 + $0x48] sm:$0xff]
  %v66 = vld [vmem:[%s2 + $0x50] sm:$0xff]
  %v67 = vld [vmem:[%s2 + $0x58] sm:$0xff]
  %v68 = vld [vmem:[%s2 + $0x60] sm:$0xff]
  %v69 = vld [vmem:[%s2 + $0x68] sm:$0xff]
  %v70 = vld [vmem:[%s2 + $0x70] sm:$0xff]
  %v71 = vld [vmem:[%s2 + $0x78] sm:$0xff]
  %v72 = vld [vmem:[%s2 + $0x80] sm:$0xff]
  %v73 = vld [vmem:[%s2 + $0x88] sm:$0xff]
  %v74 = vld [vmem:[%s2 + $0x90] sm:$0xff]
  %v75 = vld [vmem:[%s2 + $0x98] sm:$0xff]
  %v76 = vld [vmem:[%s2 + $0xa0] sm:$0xff]
  %v77 = vld [vmem:[%s2 + $0xa8] sm:$0xff]
  %v78 = vld [vmem:[%s2 + $0xb0] sm:$0xff]
  %v79 = vld [vmem:[%s2 + $0xb8] sm:$0xff]
  %v80 = vld [vmem:[%s2 + $0xc0] sm:$0xff]
  %v81 = vld [vmem:[%s2 + $0xc8] sm:$0xff]
  %v82 = vld [vmem:[%s2 + $0xd0] sm:$0xff]
  %v83 = vld [vmem:[%s2 + $0xd8] sm:$0xff]
  %v84 = vld [vmem:[%s2 + $0xe0] sm:$0xff]
  %v85 = vld [vmem:[%s2 + $0xe8] sm:$0xff]
  %v86 = vld [vmem:[%s2 + $0xf0] sm:$0xff]
  %v87 = vld [vmem:[%s2 + $0xf8] sm:$0xff]
  %v88 = vld [vmem:[%s2 + $0x100] sm:$0xff]
  %v89 = vld [vmem:[%s2 + $0x108] sm:$0xff]
  %v90 = vld [vmem:[%s2 + $0x110] sm:$0xff]
  %v91 = vld [vmem:[%s2 + $0x118] sm:$0xff]
  %v92 = vld [vmem:[%s2 + $0x120] sm:$0xff]
  %v93 = vld [vmem:[%s2 + $0x128] sm:$0xff]
  %v94 = vld [vmem:[%s2 + $0x130] sm:$0xff]
  %v95 = vld [vmem:[%s2 + $0x138] sm:$0xff]
  %v96 = vld [vmem:[%s2 + $0x140] sm:$0xff]
  %v97 = vld [vmem:[%s2 + $0x148] sm:$0xff]
  %v98 = vld [vmem:[%s2 + $0x150] sm:$0xff]
  %v99 = vld [vmem:[%s2 + $0x158] sm:$0xff]
  %v100 = vld [vmem:[%s2 + $0x160] sm:$0xff]
  %v101 = vld [vmem:[%s2 + $0x168] sm:$0xff]
  %v102 = vld [vmem:[%s2 + $0x170] sm:$0xff]
  %v103 = vld [vmem:[%s2 + $0x178] sm:$0xff]
  %v104 = vld [vmem:[%s2 + $0x180] sm:$0xff]
  %v105 = vld [vmem:[%s2 + $0x188] sm:$0xff]
  %v106 = vld [vmem:[%s2 + $0x190] sm:$0xff]
  %v107 = vld [vmem:[%s2 + $0x198] sm:$0xff]
  %v108 = vld [vmem:[%s2 + $0x1a0] sm:$0xff]
  %v109 = vld [vmem:[%s2 + $0x1a8] sm:$0xff]
  %v110 = vld [vmem:[%s2 + $0x1b0] sm:$0xff]
  %v111 = vld [vmem:[%s2 + $0x1b8] sm:$0xff]
  %v112 = vld [vmem:[%s2 + $0x1c0] sm:$0xff]
  %v113 = vld [vmem:[%s2 + $0x1c8] sm:$0xff]
  %v114 = vld [vmem:[%s2 + $0x1d0] sm:$0xff]
  %v115 = vld [vmem:[%s2 + $0x1d8] sm:$0xff]
  %v116 = vld [vmem:[%s2 + $0x1e0] sm:$0xff]
  %v117 = vld [vmem:[%s2 + $0x1e8] sm:$0xff]
  %v118 = vld [vmem:[%s2 + $0x1f0] sm:$0xff]
  %v119 = vld [vmem:[%s2 + $0x1f8] sm:$0xff]
  %v120 = vld [vmem:[%s2 + $0x200] sm:$0xff]
  %v121 = vld [vmem:[%s2 + $0x208] sm:$0xff]
  %v122 = vld [vmem:[%s2 + $0x210] sm:$0xff]
  %v123 = vld [vmem:[%s2 + $0x218] sm:$0xff]
  %v124 = vld [vmem:[%s2 + $0x220] sm:$0xff]
  %v125 = vld [vmem:[%s2 + $0x228] sm:$0xff]
  %v126 = vld [vmem:[%s2 + $0x230] sm:$0xff]
  %v127 = vld [vmem:[%s2 + $0x238] sm:$0xff]
  %v128 = vld [vmem:[%s2 + $0x240] sm:$0xff]
  %v129 = vld [vmem:[%s2 + $0x248] sm:$0xff]
  %v130 = vld [vmem:[%s2 + $0x250] sm:$0xff]
  %v131 = vld [vmem:[%s2 + $0x258] sm:$0xff]
  %v132 = vld [vmem:[%s2 + $0x260] sm:$0xff]
  %v133 = vld [vmem:[%s2 + $0x268] sm:$0xff]
  %v134 = vld [vmem:[%s2 + $0x270] sm:$0xff]
  %v135 = vld [vmem:[%s2 + $0x278] sm:$0xff]
  %v136 = vld [vmem:[%s2 + $0x280] sm:$0xff]
  %v137 = vld [vmem:[%s2 + $0x288] sm:$0xff]
  %v138 = vld [vmem:[%s2 + $0x290] sm:$0xff]
  %v139 = vld [vmem:[%s2 + $0x298] sm:$0xff]
  %v140 = vld [vmem:[%s2 + $0x2a0] sm:$0xff]
  %v141 = vld [vmem:[%s2 + $0x2a8] sm:$0xff]
  %v142 = vld [vmem:[%s2 + $0x2b0] sm:$0xff]
  %v143 = vld [vmem:[%s2 + $0x2b8] sm:$0xff]
  %v144 = vld [vmem:[%s2 + $0x2c0] sm:$0xff]
  %v145 = vld [vmem:[%s2 + $0x2c8] sm:$0xff]
  %v146 = vld [vmem:[%s2 + $0x2d0] sm:$0xff]
  %v147 = vld [vmem:[%s2 + $0x2d8] sm:$0xff]
  %v148 = vld [vmem:[%s2 + $0x2e0] sm:$0xff]
  %v149 = vld [vmem:[%s2 + $0x2e8] sm:$0xff]
  %v150 = vld [vmem:[%s2 + $0x2f0] sm:$0xff]
  %v151 = vld [vmem:[%s2 + $0x2f8] sm:$0xff]
  %v152 = vld [vmem:[%s2 + $0x300] sm:$0xff]
  %v153 = vld [vmem:[%s2 + $0x308] sm:$0xff]
  %v154 = vld [vmem:[%s2 + $0x310] sm:$0xff]
  %v155 = vld [vmem:[%s2 + $0x318] sm:$0xff]
  %v156 = vld [vmem:[%s2 + $0x320] sm:$0xff]
  %v157 = vld [vmem:[%s2 + $0x328] sm:$0xff]
  %v158 = vld [vmem:[%s2 + $0x330] sm:$0xff]
  %v159 = vld [vmem:[%s2 + $0x338] sm:$0xff]
  %v160 = vld [vmem:[%s2 + $0x340] sm:$0xff]
  %v161 = vld [vmem:[%s2 + $0x348] sm:$0xff]
  %v162 = vld [vmem:[%s2 + $0x350] sm:$0xff]
  %v163 = vld [vmem:[%s2 + $0x358] sm:$0xff]
  %v164 = vld [vmem:[%s2 + $0x360] sm:$0xff]
  %v165 = vld [vmem:[%s2 + $0x368] sm:$0xff]
  %v166 = vld [vmem:[%s2 + $0x370] sm:$0xff]
  %v167 = vld [vmem:[%s2 + $0x378] sm:$0xff]
  %v168 = vld [vmem:[%s3] sm:$0x1]
  %v170 = vlaneseq
  %v171 = vshrl.u32 %v170, 7
  %v172 = vsub.s32 0, %v171
  %v173 = vrot.slane %v168, %v172
  %175 = vmatprep.subr.mxu0 0.0
  %176 = vmatpush1.msra.mxu0 %v56
  %177 = vmatprep.subr.mxu0 0.0
  %178 = vmatpush1.msra.mxu0 %v57
  %179 = vmatprep.subr.mxu0 0.0
  %180 = vmatpush1.msra.mxu0 %v58
  %181 = vmatprep.subr.mxu0 0.0
  %182 = vmatpush1.msra.mxu0 %v59
  %183 = vmatprep.subr.mxu0 0.0
  %184 = vmatpush1.msra.mxu0 %v60
  %185 = vmatprep.subr.mxu0 0.0
  %186 = vmatpush1.msra.mxu0 %v61
  %187 = vmatprep.subr.mxu0 0.0
  %188 = vmatpush1.msra.mxu0 %v62
  %189 = vmatprep.subr.mxu0 0.0
  %190 = vmatpush1.msra.mxu0 %v63
  %191 = vmatprep.subr.mxu0 0.0
  %192 = vmatpush1.msra.mxu0 %v64
  %193 = vmatprep.subr.mxu0 0.0
  %194 = vmatpush1.msra.mxu0 %v65
  %195 = vmatprep.subr.mxu0 0.0
  %196 = vmatpush1.msra.mxu0 %v66
  %197 = vmatprep.subr.mxu0 0.0
  %198 = vmatpush1.msra.mxu0 %v67
  %199 = vmatprep.subr.mxu0 0.0
  %200 = vmatpush1.msra.mxu0 %v68
  %201 = vmatprep.subr.mxu0 0.0
  %202 = vmatpush1.msra.mxu0 %v69
  %203 = vmatprep.subr.mxu0 0.0
  %204 = vmatpush1.msra.mxu0 %v70
  %205 = vmatprep.subr.mxu0 0.0
  %206 = vmatpush1.msra.mxu0 %v71
  %207 = vmatprep.subr.mxu0 0.0
  %208 = vmatpush1.msra.mxu0 %v72
  %209 = vmatprep.subr.mxu0 0.0
  %210 = vmatpush1.msra.mxu0 %v73
  %211 = vmatprep.subr.mxu0 0.0
  %212 = vmatpush1.msra.mxu0 %v74
  %213 = vmatprep.subr.mxu0 0.0
  %214 = vmatpush1.msra.mxu0 %v75
  %215 = vmatprep.subr.mxu0 0.0
  %216 = vmatpush1.msra.mxu0 %v76
  %217 = vmatprep.subr.mxu0 0.0
  %218 = vmatpush1.msra.mxu0 %v77
  %219 = vmatprep.subr.mxu0 0.0
  %220 = vmatpush1.msra.mxu0 %v78
  %221 = vmatprep.subr.mxu0 0.0
  %222 = vmatpush1.msra.mxu0 %v79
  %223 = vmatprep.subr.mxu0 0.0
  %224 = vmatpush1.msra.mxu0 %v80
  %225 = vmatprep.subr.mxu0 0.0
  %226 = vmatpush1.msra.mxu0 %v81
  %227 = vmatprep.subr.mxu0 0.0
  %228 = vmatpush1.msra.mxu0 %v82
  %229 = vmatprep.subr.mxu0 0.0
  %230 = vmatpush1.msra.mxu0 %v83
  %231 = vmatprep.subr.mxu0 0.0
  %232 = vmatpush1.msra.mxu0 %v84
  %233 = vmatprep.subr.mxu0 0.0
  %234 = vmatpush1.msra.mxu0 %v85
  %235 = vmatprep.subr.mxu0 0.0
  %236 = vmatpush1.msra.mxu0 %v86
  %237 = vmatprep.subr.mxu0 0.0
  %238 = vmatpush1.msra.mxu0 %v87
  %239 = vmatprep.mubr.f32.mxu0 %v50
  %240 = vmatmul.mubr.f32.gmra.mrb[0].mxu0 %v49
  %v241 = vpop.f32.mrb[0].mxu0
  %v242 = vadd.f32 %v173, %v241
  %v243 = vpop.f32.mrb[0].mxu0
  %244 = vdwg.mxu0
  %245 = vmatprep.subr.mxu0 0.0
  %246 = vmatpush1.msra.mxu0 %v88
  %247 = vmatprep.subr.mxu0 0.0
  %248 = vmatpush1.msra.mxu0 %v89
  %249 = vmatprep.subr.mxu0 0.0
  %250 = vmatpush1.msra.mxu0 %v90
  %251 = vmatprep.subr.mxu0 0.0
  %252 = vmatpush1.msra.mxu0 %v91
  %253 = vmatprep.subr.mxu0 0.0
  %254 = vmatpush1.msra.mxu0 %v92
  %255 = vmatprep.subr.mxu0 0.0
  %256 = vmatpush1.msra.mxu0 %v93
  %257 = vmatprep.subr.mxu0 0.0
  %258 = vmatpush1.msra.mxu0 %v94
  %259 = vmatprep.subr.mxu0 0.0
  %260 = vmatpush1.msra.mxu0 %v95
  %261 = vmatprep.subr.mxu0 0.0
  %262 = vmatpush1.msra.mxu0 %v96
  %263 = vmatprep.subr.mxu0 0.0
  %264 = vmatpush1.msra.mxu0 %v97
  %265 = vmatprep.subr.mxu0 0.0
  %266 = vmatpush1.msra.mxu0 %v98
  %267 = vmatprep.subr.mxu0 0.0
  %268 = vmatpush1.msra.mxu0 %v99
  %269 = vmatprep.subr.mxu0 0.0
  %270 = vmatpush1.msra.mxu0 %v100
  %271 = vmatprep.subr.mxu0 0.0
  %272 = vmatpush1.msra.mxu0 %v101
  %273 = vmatprep.subr.mxu0 0.0
  %274 = vmatpush1.msra.mxu0 %v102
  %275 = vmatprep.subr.mxu0 0.0
  %276 = vmatpush1.msra.mxu0 %v103
  %277 = vmatprep.subr.mxu0 0.0
  %278 = vmatpush1.msra.mxu0 %v104
  %279 = vmatprep.subr.mxu0 0.0
  %280 = vmatpush1.msra.mxu0 %v105
  %281 = vmatprep.subr.mxu0 0.0
  %282 = vmatpush1.msra.mxu0 %v106
  %283 = vmatprep.subr.mxu0 0.0
  %284 = vmatpush1.msra.mxu0 %v107
  %285 = vmatprep.subr.mxu0 0.0
  %286 = vmatpush1.msra.mxu0 %v108
  %287 = vmatprep.subr.mxu0 0.0
  %288 = vmatpush1.msra.mxu0 %v109
  %289 = vmatprep.subr.mxu0 0.0
  %290 = vmatpush1.msra.mxu0 %v110
  %291 = vmatprep.subr.mxu0 0.0
  %292 = vmatpush1.msra.mxu0 %v111
  %293 = vmatprep.subr.mxu0 0.0
  %294 = vmatpush1.msra.mxu0 %v112
  %295 = vmatprep.subr.mxu0 0.0
  %296 = vmatpush1.msra.mxu0 %v113
  %297 = vmatprep.subr.mxu0 0.0
  %298 = vmatpush1.msra.mxu0 %v114
  %299 = vmatprep.subr.mxu0 0.0
  %300 = vmatpush1.msra.mxu0 %v115
  %301 = vmatprep.subr.mxu0 0.0
  %302 = vmatpush1.msra.mxu0 %v116
  %303 = vmatprep.subr.mxu0 0.0
  %304 = vmatpush1.msra.mxu0 %v117
  %305 = vmatprep.subr.mxu0 0.0
  %306 = vmatpush1.msra.mxu0 %v118
  %307 = vmatprep.subr.mxu0 0.0
  %308 = vmatpush1.msra.mxu0 %v119
  %309 = vmatprep.mubr.f32.mxu0 %v52
  %310 = vmatmul.mubr.f32.gmra.mrb[0].mxu0 %v51
  %v311 = vpop.f32.mrb[0].mxu0
  %v312 = vadd.f32 %v242, %v311
  %v313 = vpop.f32.mrb[0].mxu0
  %314 = vdwg.mxu0
  %315 = vmatprep.subr.mxu0 0.0
  %316 = vmatpush1.msra.mxu0 %v120
  %317 = vmatprep.subr.mxu0 0.0
  %318 = vmatpush1.msra.mxu0 %v121
  %319 = vmatprep.subr.mxu0 0.0
  %320 = vmatpush1.msra.mxu0 %v122
  %321 = vmatprep.subr.mxu0 0.0
  %322 = vmatpush1.msra.mxu0 %v123
  %323 = vmatprep.subr.mxu0 0.0
  %324 = vmatpush1.msra.mxu0 %v124
  %325 = vmatprep.subr.mxu0 0.0
  %326 = vmatpush1.msra.mxu0 %v125
  %327 = vmatprep.subr.mxu0 0.0
  %328 = vmatpush1.msra.mxu0 %v126
  %329 = vmatprep.subr.mxu0 0.0
  %330 = vmatpush1.msra.mxu0 %v127
  %331 = vmatprep.subr.mxu0 0.0
  %332 = vmatpush1.msra.mxu0 %v128
  %333 = vmatprep.subr.mxu0 0.0
  %334 = vmatpush1.msra.mxu0 %v129
  %335 = vmatprep.subr.mxu0 0.0
  %336 = vmatpush1.msra.mxu0 %v130
  %337 = vmatprep.subr.mxu0 0.0
  %338 = vmatpush1.msra.mxu0 %v131
  %339 = vmatprep.subr.mxu0 0.0
  %340 = vmatpush1.msra.mxu0 %v132
  %341 = vmatprep.subr.mxu0 0.0
  %342 = vmatpush1.msra.mxu0 %v133
  %343 = vmatprep.subr.mxu0 0.0
  %344 = vmatpush1.msra.mxu0 %v134
  %345 = vmatprep.subr.mxu0 0.0
  %346 = vmatpush1.msra.mxu0 %v135
  %347 = vmatprep.subr.mxu0 0.0
  %348 = vmatpush1.msra.mxu0 %v136
  %349 = vmatprep.subr.mxu0 0.0
  %350 = vmatpush1.msra.mxu0 %v137
  %351 = vmatprep.subr.mxu0 0.0
  %352 = vmatpush1.msra.mxu0 %v138
  %353 = vmatprep.subr.mxu0 0.0
  %354 = vmatpush1.msra.mxu0 %v139
  %355 = vmatprep.subr.mxu0 0.0
  %356 = vmatpush1.msra.mxu0 %v140
  %357 = vmatprep.subr.mxu0 0.0
  %358 = vmatpush1.msra.mxu0 %v141
  %359 = vmatprep.subr.mxu0 0.0
  %360 = vmatpush1.msra.mxu0 %v142
  %361 = vmatprep.subr.mxu0 0.0
  %362 = vmatpush1.msra.mxu0 %v143
  %363 = vmatprep.subr.mxu0 0.0
  %364 = vmatpush1.msra.mxu0 %v144
  %365 = vmatprep.subr.mxu0 0.0
  %366 = vmatpush1.msra.mxu0 %v145
  %367 = vmatprep.subr.mxu0 0.0
  %368 = vmatpush1.msra.mxu0 %v146
  %369 = vmatprep.subr.mxu0 0.0
  %370 = vmatpush1.msra.mxu0 %v147
  %371 = vmatprep.subr.mxu0 0.0
  %372 = vmatpush1.msra.mxu0 %v148
  %373 = vmatprep.subr.mxu0 0.0
  %374 = vmatpush1.msra.mxu0 %v149
  %375 = vmatprep.subr.mxu0 0.0
  %376 = vmatpush1.msra.mxu0 %v150
  %377 = vmatprep.subr.mxu0 0.0
  %378 = vmatpush1.msra.mxu0 %v151
  %379 = vmatprep.mubr.f32.mxu0 %v54
  %380 = vmatmul.mubr.f32.gmra.mrb[0].mxu0 %v53
  %v381 = vpop.f32.mrb[0].mxu0
  %v382 = vadd.f32 %v312, %v381
  %v383 = vpop.f32.mrb[0].mxu0
  %384 = vdwg.mxu0
  %385 = vmatprep.subr.mxu0 0.0
  %386 = vmatpush1.msra.mxu0 %v152
  %387 = vmatprep.subr.mxu0 0.0
  %388 = vmatpush1.msra.mxu0 %v153
  %389 = vmatprep.subr.mxu0 0.0
  %390 = vmatpush1.msra.mxu0 %v154
  %391 = vmatprep.subr.mxu0 0.0
  %392 = vmatpush1.msra.mxu0 %v155
  %393 = vmatprep.subr.mxu0 0.0
  %394 = vmatpush1.msra.mxu0 %v156
  %395 = vmatprep.subr.mxu0 0.0
  %396 = vmatpush1.msra.mxu0 %v157
  %397 = vmatprep.subr.mxu0 0.0
  %398 = vmatpush1.msra.mxu0 %v158
  %399 = vmatprep.subr.mxu0 0.0
  %400 = vmatpush1.msra.mxu0 %v159
  %401 = vmatprep.subr.mxu0 0.0
  %402 = vmatpush1.msra.mxu0 %v160
  %403 = vmatprep.subr.mxu0 0.0
  %404 = vmatpush1.msra.mxu0 %v161
  %405 = vmatprep.subr.mxu0 0.0
  %406 = vmatpush1.msra.mxu0 %v162
  %407 = vmatprep.subr.mxu0 0.0
  %408 = vmatpush1.msra.mxu0 %v163
  %409 = vmatprep.subr.mxu0 0.0
  %410 = vmatpush1.msra.mxu0 %v164
  %411 = vmatprep.subr.mxu0 0.0
  %412 = vmatpush1.msra.mxu0 %v165
  %413 = vmatprep.subr.mxu0 0.0
  %414 = vmatpush1.msra.mxu0 %v166
  %415 = vmatprep.subr.mxu0 0.0
  %416 = vmatpush1.msra.mxu0 %v167
  %417 = vmatprep.subr.mxu0 0.0
  %418 = vmatpush1.msra.mxu0 0.0
  %419 = vmatprep.subr.mxu0 0.0
  %420 = vmatpush1.msra.mxu0 0.0
  %421 = vmatprep.subr.mxu0 0.0
  %422 = vmatpush1.msra.mxu0 0.0
  %423 = vmatprep.subr.mxu0 0.0
  %424 = vmatpush1.msra.mxu0 0.0
  %425 = vmatprep.subr.mxu0 0.0
  %426 = vmatpush1.msra.mxu0 0.0
  %427 = vmatprep.subr.mxu0 0.0
  %428 = vmatpush1.msra.mxu0 0.0
  %429 = vmatprep.subr.mxu0 0.0
  %430 = vmatpush1.msra.mxu0 0.0
  %431 = vmatprep.subr.mxu0 0.0
  %432 = vmatpush1.msra.mxu0 0.0
  %433 = vmatprep.subr.mxu0 0.0
  %434 = vmatpush1.msra.mxu0 0.0
  %435 = vmatprep.subr.mxu0 0.0
  %436 = vmatpush1.msra.mxu0 0.0
  %437 = vmatprep.subr.mxu0 0.0
  %438 = vmatpush1.msra.mxu0 0.0
  %439 = vmatprep.subr.mxu0 0.0
  %440 = vmatpush1.msra.mxu0 0.0
  %441 = vmatprep.subr.mxu0 0.0
  %442 = vmatpush1.msra.mxu0 0.0
  %443 = vmatprep.subr.mxu0 0.0
  %444 = vmatpush1.msra.mxu0 0.0
  %445 = vmatprep.subr.mxu0 0.0
  %446 = vmatpush1.msra.mxu0 0.0
  %447 = vmatprep.subr.mxu0 0.0
  %448 = vmatpush1.msra.mxu0 0.0
  %449 = vmatprep.mubr.f32.mxu0 0.0
  %450 = vmatmul.mubr.f32.gmra.mrb[0].mxu0 %v55
  %v451 = vpop.f32.mrb[0].mxu0
  %v452 = vadd.f32 %v382, %v451
  %v453 = vpop.f32.mrb[0].mxu0
  %454 = vdwg.mxu0
  %v455 = vmax.f32 %v452, 0.0
  %v456 = vld [vmem:[%s4] sm:$0xff]
  %v457 = vld [vmem:[%s4 + $0x8] sm:$0xff]
  %v458 = vld [vmem:[%s4 + $0x10] sm:$0xff]
  %v459 = vld [vmem:[%s4 + $0x18] sm:$0xff]
  %v460 = vld [vmem:[%s4 + $0x20] sm:$0xff]
  %v461 = vld [vmem:[%s4 + $0x28] sm:$0xff]
  %v462 = vld [vmem:[%s4 + $0x30] sm:$0xff]
  %v463 = vld [vmem:[%s4 + $0x38] sm:$0xff]
  %v464 = vld [vmem:[%s4 + $0x40] sm:$0xff]
  %v465 = vld [vmem:[%s4 + $0x48] sm:$0xff]
  %v466 = vld [vmem:[%s4 + $0x50] sm:$0xff]
  %v467 = vld [vmem:[%s4 + $0x58] sm:$0xff]
  %v468 = vld [vmem:[%s4 + $0x60] sm:$0xff]
  %v469 = vld [vmem:[%s4 + $0x68] sm:$0xff]
  %v470 = vld [vmem:[%s4 + $0x70] sm:$0xff]
  %v471 = vld [vmem:[%s4 + $0x78] sm:$0xff]
  %v472 = vld [vmem:[%s5] sm:$0x1]
  %v474 = vlaneseq
  %v475 = vshrl.u32 %v474, 7
  %v476 = vsub.s32 0, %v475
  %v477 = vrot.slane %v472, %v476
  %479 = vmatprep.subr.mxu0 0.0
  %480 = vmatpush1.msra.mxu0 %v456
  %481 = vmatprep.subr.mxu0 0.0
  %482 = vmatpush1.msra.mxu0 %v457
  %483 = vmatprep.subr.mxu0 0.0
  %484 = vmatpush1.msra.mxu0 %v458
  %485 = vmatprep.subr.mxu0 0.0
  %486 = vmatpush1.msra.mxu0 %v459
  %487 = vmatprep.subr.mxu0 0.0
  %488 = vmatpush1.msra.mxu0 %v460
  %489 = vmatprep.subr.mxu0 0.0
  %490 = vmatpush1.msra.mxu0 %v461
  %491 = vmatprep.subr.mxu0 0.0
  %492 = vmatpush1.msra.mxu0 %v462
  %493 = vmatprep.subr.mxu0 0.0
  %494 = vmatpush1.msra.mxu0 %v463
  %495 = vmatprep.subr.mxu0 0.0
  %496 = vmatpush1.msra.mxu0 %v464
  %497 = vmatprep.subr.mxu0 0.0
  %498 = vmatpush1.msra.mxu0 %v465
  %499 = vmatprep.subr.mxu0 0.0
  %500 = vmatpush1.msra.mxu0 %v466
  %501 = vmatprep.subr.mxu0 0.0
  %502 = vmatpush1.msra.mxu0 %v467
  %503 = vmatprep.subr.mxu0 0.0
  %504 = vmatpush1.msra.mxu0 %v468
  %505 = vmatprep.subr.mxu0 0.0
  %506 = vmatpush1.msra.mxu0 %v469
  %507 = vmatprep.subr.mxu0 0.0
  %508 = vmatpush1.msra.mxu0 %v470
  %509 = vmatprep.subr.mxu0 0.0
  %510 = vmatpush1.msra.mxu0 %v471
  %511 = vmatprep.subr.mxu0 0.0
  %512 = vmatpush1.msra.mxu0 0.0
  %513 = vmatprep.subr.mxu0 0.0
  %514 = vmatpush1.msra.mxu0 0.0
  %515 = vmatprep.subr.mxu0 0.0
  %516 = vmatpush1.msra.mxu0 0.0
  %517 = vmatprep.subr.mxu0 0.0
  %518 = vmatpush1.msra.mxu0 0.0
  %519 = vmatprep.subr.mxu0 0.0
  %520 = vmatpush1.msra.mxu0 0.0
  %521 = vmatprep.subr.mxu0 0.0
  %522 = vmatpush1.msra.mxu0 0.0
  %523 = vmatprep.subr.mxu0 0.0
  %524 = vmatpush1.msra.mxu0 0.0
  %525 = vmatprep.subr.mxu0 0.0
  %526 = vmatpush1.msra.mxu0 0.0
  %527 = vmatprep.subr.mxu0 0.0
  %528 = vmatpush1.msra.mxu0 0.0
  %529 = vmatprep.subr.mxu0 0.0
  %530 = vmatpush1.msra.mxu0 0.0
  %531 = vmatprep.subr.mxu0 0.0
  %532 = vmatpush1.msra.mxu0 0.0
  %533 = vmatprep.subr.mxu0 0.0
  %534 = vmatpush1.msra.mxu0 0.0
  %535 = vmatprep.subr.mxu0 0.0
  %536 = vmatpush1.msra.mxu0 0.0
  %537 = vmatprep.subr.mxu0 0.0
  %538 = vmatpush1.msra.mxu0 0.0
  %539 = vmatprep.subr.mxu0 0.0
  %540 = vmatpush1.msra.mxu0 0.0
  %541 = vmatprep.subr.mxu0 0.0
  %542 = vmatpush1.msra.mxu0 0.0
  %543 = vmatprep.mubr.f32.mxu0 0.0
  %544 = vmatmul.mubr.f32.gmra.mrb[0].mxu0 %v455
  %v545 = vpop.f32.mrb[0].mxu0
  %v546 = vadd.f32 %v477, %v545
  %v547 = vpop.f32.mrb[0].mxu0
  %548 = vdwg.mxu0
  %v549 = vmax.f32 %v546, 0.0
  %v550 = vld [vmem:[%s6] sm:$0xff]
  %v551 = vld [vmem:[%s6 + $0x8] sm:$0xff]
  %v552 = vld [vmem:[%s6 + $0x10] sm:$0xff]
  %v553 = vld [vmem:[%s6 + $0x18] sm:$0xff]
  %v554 = vld [vmem:[%s6 + $0x20] sm:$0xff]
  %v555 = vld [vmem:[%s6 + $0x28] sm:$0xff]
  %v556 = vld [vmem:[%s6 + $0x30] sm:$0xff]
  %v557 = vld [vmem:[%s6 + $0x38] sm:$0xff]
  %v558 = vld [vmem:[%s7] sm:$0x1]
  %v560 = vlaneseq
  %v561 = vshrl.u32 %v560, 7
  %v562 = vsub.s32 0, %v561
  %v563 = vrot.slane %v558, %v562
  %vm565 = vcmask 523264
  %v567 = vsel %vm565, %v549, 0
  %569 = vmatprep.subr.mxu0 0.0
  %570 = vmatpush1.msra.mxu0 %v550
  %571 = vmatprep.subr.mxu0 0.0
  %572 = vmatpush1.msra.mxu0 %v551
  %573 = vmatprep.subr.mxu0 0.0
  %574 = vmatpush1.msra.mxu0 %v552
  %575 = vmatprep.subr.mxu0 0.0
  %576 = vmatpush1.msra.mxu0 %v553
  %577 = vmatprep.subr.mxu0 0.0
  %578 = vmatpush1.msra.mxu0 %v554
  %579 = vmatprep.subr.mxu0 0.0
  %580 = vmatpush1.msra.mxu0 %v555
  %581 = vmatprep.subr.mxu0 0.0
  %582 = vmatpush1.msra.mxu0 %v556
  %583 = vmatprep.subr.mxu0 0.0
  %584 = vmatpush1.msra.mxu0 %v557
  %585 = vmatprep.subr.mxu0 0.0
  %586 = vmatpush1.msra.mxu0 0.0
  %587 = vmatprep.subr.mxu0 0.0
  %588 = vmatpush1.msra.mxu0 0.0
  %589 = vmatprep.subr.mxu0 0.0
  %590 = vmatpush1.msra.mxu0 0.0
  %591 = vmatprep.subr.mxu0 0.0
  %592 = vmatpush1.msra.mxu0 0.0
  %593 = vmatprep.subr.mxu0 0.0
  %594 = vmatpush1.msra.mxu0 0.0
  %595 = vmatprep.subr.mxu0 0.0
  %596 = vmatpush1.msra.mxu0 0.0
  %597 = vmatprep.subr.mxu0 0.0
  %598 = vmatpush1.msra.mxu0 0.0
  %599 = vmatprep.subr.mxu0 0.0
  %600 = vmatpush1.msra.mxu0 0.0
  %601 = vmatprep.subr.mxu0 0.0
  %602 = vmatpush1.msra.mxu0 0.0
  %603 = vmatprep.subr.mxu0 0.0
  %604 = vmatpush1.msra.mxu0 0.0
  %605 = vmatprep.subr.mxu0 0.0
  %606 = vmatpush1.msra.mxu0 0.0
  %607 = vmatprep.subr.mxu0 0.0
  %608 = vmatpush1.msra.mxu0 0.0
  %609 = vmatprep.subr.mxu0 0.0
  %610 = vmatpush1.msra.mxu0 0.0
  %611 = vmatprep.subr.mxu0 0.0
  %612 = vmatpush1.msra.mxu0 0.0
  %613 = vmatprep.subr.mxu0 0.0
  %614 = vmatpush1.msra.mxu0 0.0
  %615 = vmatprep.subr.mxu0 0.0
  %616 = vmatpush1.msra.mxu0 0.0
  %617 = vmatprep.subr.mxu0 0.0
  %618 = vmatpush1.msra.mxu0 0.0
  %619 = vmatprep.subr.mxu0 0.0
  %620 = vmatpush1.msra.mxu0 0.0
  %621 = vmatprep.subr.mxu0 0.0
  %622 = vmatpush1.msra.mxu0 0.0
  %623 = vmatprep.subr.mxu0 0.0
  %624 = vmatpush1.msra.mxu0 0.0
  %625 = vmatprep.subr.mxu0 0.0
  %626 = vmatpush1.msra.mxu0 0.0
  %627 = vmatprep.subr.mxu0 0.0
  %628 = vmatpush1.msra.mxu0 0.0
  %629 = vmatprep.subr.mxu0 0.0
  %630 = vmatpush1.msra.mxu0 0.0
  %631 = vmatprep.subr.mxu0 0.0
  %632 = vmatpush1.msra.mxu0 0.0
  %633 = vmatprep.mubr.f32.mxu0 0.0
  %634 = vmatmul.mubr.f32.gmra.mrb[0].mxu0 %v567
  %v635 = vpop.f32.mrb[0].mxu0
  %v636 = vadd.f32 %v563, %v635
  %v637 = vpop.f32.mrb[0].mxu0
  %638 = vdwg.mxu0
  %vm639 = vcmask 261120
  %640 = vst.msk [vmem:[%s15] sm:$0xff] %vm639, %v636
  %v641 = vld [vmem:[%s1] sm:$0xff]
  %v642 = vmul.f32 %v636, 0.5
  %v643 = vmul.f32 %v642, 1.442695
  %v644 = vpow.pop %v643
  %646 = vrot.lane.b32.xlu0 %v644, 112
  %v647 = vpop.permute.xlu0 %646
  %v649 = vmul.f32 %v641, %v647
  %v650 = vadd.f32 %v649, %v636
  %v651 = vld [vmem:[%s8] sm:$0xff]
  %v652 = vld [vmem:[%s8 + $0x8] sm:$0xff]
  %v653 = vld [vmem:[%s9] sm:$0x1]
  %v655 = vlaneseq
  %v656 = vshrl.u32 %v655, 7
  %v657 = vsub.s32 0, %v656
  %v658 = vrot.slane %v653, %v657
  %vm660 = vcmask 130048
  %v662 = vsel %vm660, %v650, 0
  %664 = vmatprep.subr.mxu0 0.0
  %665 = vmatpush1.msra.mxu0 %v651
  %666 = vmatprep.subr.mxu0 0.0
  %667 = vmatpush1.msra.mxu0 %v652
  %668 = vmatprep.subr.mxu0 0.0
  %669 = vmatpush1.msra.mxu0 0.0
  %670 = vmatprep.subr.mxu0 0.0
  %671 = vmatpush1.msra.mxu0 0.0
  %672 = vmatprep.subr.mxu0 0.0
  %673 = vmatpush1.msra.mxu0 0.0
  %674 = vmatprep.subr.mxu0 0.0
  %675 = vmatpush1.msra.mxu0 0.0
  %676 = vmatprep.subr.mxu0 0.0
  %677 = vmatpush1.msra.mxu0 0.0
  %678 = vmatprep.subr.mxu0 0.0
  %679 = vmatpush1.msra.mxu0 0.0
  %680 = vmatprep.subr.mxu0 0.0
  %681 = vmatpush1.msra.mxu0 0.0
  %682 = vmatprep.subr.mxu0 0.0
  %683 = vmatpush1.msra.mxu0 0.0
  %684 = vmatprep.subr.mxu0 0.0
  %685 = vmatpush1.msra.mxu0 0.0
  %686 = vmatprep.subr.mxu0 0.0
  %687 = vmatpush1.msra.mxu0 0.0
  %688 = vmatprep.subr.mxu0 0.0
  %689 = vmatpush1.msra.mxu0 0.0
  %690 = vmatprep.subr.mxu0 0.0
  %691 = vmatpush1.msra.mxu0 0.0
  %692 = vmatprep.subr.mxu0 0.0
  %693 = vmatpush1.msra.mxu0 0.0
  %694 = vmatprep.subr.mxu0 0.0
  %695 = vmatpush1.msra.mxu0 0.0
  %696 = vmatprep.subr.mxu0 0.0
  %697 = vmatpush1.msra.mxu0 0.0
  %698 = vmatprep.subr.mxu0 0.0
  %699 = vmatpush1.msra.mxu0 0.0
  %700 = vmatprep.subr.mxu0 0.0
  %701 = vmatpush1.msra.mxu0 0.0
  %702 = vmatprep.subr.mxu0 0.0
  %703 = vmatpush1.msra.mxu0 0.0
  %704 = vmatprep.subr.mxu0 0.0
  %705 = vmatpush1.msra.mxu0 0.0
  %706 = vmatprep.subr.mxu0 0.0
  %707 = vmatpush1.msra.mxu0 0.0
  %708 = vmatprep.subr.mxu0 0.0
  %709 = vmatpush1.msra.mxu0 0.0
  %710 = vmatprep.subr.mxu0 0.0
  %711 = vmatpush1.msra.mxu0 0.0
  %712 = vmatprep.subr.mxu0 0.0
  %713 = vmatpush1.msra.mxu0 0.0
  %714 = vmatprep.subr.mxu0 0.0
  %715 = vmatpush1.msra.mxu0 0.0
  %716 = vmatprep.subr.mxu0 0.0
  %717 = vmatpush1.msra.mxu0 0.0
  %718 = vmatprep.subr.mxu0 0.0
  %719 = vmatpush1.msra.mxu0 0.0
  %720 = vmatprep.subr.mxu0 0.0
  %721 = vmatpush1.msra.mxu0 0.0
  %722 = vmatprep.subr.mxu0 0.0
  %723 = vmatpush1.msra.mxu0 0.0
  %724 = vmatprep.subr.mxu0 0.0
  %725 = vmatpush1.msra.mxu0 0.0
  %726 = vmatprep.subr.mxu0 0.0
  %727 = vmatpush1.msra.mxu0 0.0
  %728 = vmatprep.mubr.f32.mxu0 0.0
  %729 = vmatmul.mubr.f32.gmra.mrb[0].mxu0 %v662
  %v730 = vpop.f32.mrb[0].mxu0
  %v731 = vadd.f32 %v658, %v730
  %v732 = vpop.f32.mrb[0].mxu0
  %733 = vdwg.mxu0
  %v734 = vmax.f32 %v731, 0.0
  %v735 = vld [vmem:[%s10] sm:$0xff]
  %v736 = vld [vmem:[%s10 + $0x8] sm:$0xff]
  %v737 = vld [vmem:[%s10 + $0x10] sm:$0xff]
  %v738 = vld [vmem:[%s10 + $0x18] sm:$0xff]
  %v739 = vld [vmem:[%s10 + $0x20] sm:$0xff]
  %v740 = vld [vmem:[%s10 + $0x28] sm:$0xff]
  %v741 = vld [vmem:[%s10 + $0x30] sm:$0xff]
  %v742 = vld [vmem:[%s10 + $0x38] sm:$0xff]
  %v743 = vld [vmem:[%s11] sm:$0x1]
  %v745 = vlaneseq
  %v746 = vshrl.u32 %v745, 7
  %v747 = vsub.s32 0, %v746
  %v748 = vrot.slane %v743, %v747
  %v751 = vsel %vm565, %v734, 0
  %753 = vmatprep.subr.mxu0 0.0
  %754 = vmatpush1.msra.mxu0 %v735
  %755 = vmatprep.subr.mxu0 0.0
  %756 = vmatpush1.msra.mxu0 %v736
  %757 = vmatprep.subr.mxu0 0.0
  %758 = vmatpush1.msra.mxu0 %v737
  %759 = vmatprep.subr.mxu0 0.0
  %760 = vmatpush1.msra.mxu0 %v738
  %761 = vmatprep.subr.mxu0 0.0
  %762 = vmatpush1.msra.mxu0 %v739
  %763 = vmatprep.subr.mxu0 0.0
  %764 = vmatpush1.msra.mxu0 %v740
  %765 = vmatprep.subr.mxu0 0.0
  %766 = vmatpush1.msra.mxu0 %v741
  %767 = vmatprep.subr.mxu0 0.0
  %768 = vmatpush1.msra.mxu0 %v742
  %769 = vmatprep.subr.mxu0 0.0
  %770 = vmatpush1.msra.mxu0 0.0
  %771 = vmatprep.subr.mxu0 0.0
  %772 = vmatpush1.msra.mxu0 0.0
  %773 = vmatprep.subr.mxu0 0.0
  %774 = vmatpush1.msra.mxu0 0.0
  %775 = vmatprep.subr.mxu0 0.0
  %776 = vmatpush1.msra.mxu0 0.0
  %777 = vmatprep.subr.mxu0 0.0
  %778 = vmatpush1.msra.mxu0 0.0
  %779 = vmatprep.subr.mxu0 0.0
  %780 = vmatpush1.msra.mxu0 0.0
  %781 = vmatprep.subr.mxu0 0.0
  %782 = vmatpush1.msra.mxu0 0.0
  %783 = vmatprep.subr.mxu0 0.0
  %784 = vmatpush1.msra.mxu0 0.0
  %785 = vmatprep.subr.mxu0 0.0
  %786 = vmatpush1.msra.mxu0 0.0
  %787 = vmatprep.subr.mxu0 0.0
  %788 = vmatpush1.msra.mxu0 0.0
  %789 = vmatprep.subr.mxu0 0.0
  %790 = vmatpush1.msra.mxu0 0.0
  %791 = vmatprep.subr.mxu0 0.0
  %792 = vmatpush1.msra.mxu0 0.0
  %793 = vmatprep.subr.mxu0 0.0
  %794 = vmatpush1.msra.mxu0 0.0
  %795 = vmatprep.subr.mxu0 0.0
  %796 = vmatpush1.msra.mxu0 0.0
  %797 = vmatprep.subr.mxu0 0.0
  %798 = vmatpush1.msra.mxu0 0.0
  %799 = vmatprep.subr.mxu0 0.0
  %800 = vmatpush1.msra.mxu0 0.0
  %801 = vmatprep.subr.mxu0 0.0
  %802 = vmatpush1.msra.mxu0 0.0
  %803 = vmatprep.subr.mxu0 0.0
  %804 = vmatpush1.msra.mxu0 0.0
  %805 = vmatprep.subr.mxu0 0.0
  %806 = vmatpush1.msra.mxu0 0.0
  %807 = vmatprep.subr.mxu0 0.0
  %808 = vmatpush1.msra.mxu0 0.0
  %809 = vmatprep.subr.mxu0 0.0
  %810 = vmatpush1.msra.mxu0 0.0
  %811 = vmatprep.subr.mxu0 0.0
  %812 = vmatpush1.msra.mxu0 0.0
  %813 = vmatprep.subr.mxu0 0.0
  %814 = vmatpush1.msra.mxu0 0.0
  %815 = vmatprep.subr.mxu0 0.0
  %816 = vmatpush1.msra.mxu0 0.0
  %817 = vmatprep.mubr.f32.mxu0 0.0
  %818 = vmatmul.mubr.f32.gmra.mrb[0].mxu0 %v751
  %v819 = vpop.f32.mrb[0].mxu0
  %v820 = vadd.f32 %v748, %v819
  %v821 = vpop.f32.mrb[0].mxu0
  %822 = vdwg.mxu0
  %v823 = vmax.f32 %v820, 0.0
  %v824 = vld [vmem:[%s12] sm:$0xff]
  %v825 = vld [vmem:[%s12 + $0x8] sm:$0xff]
  %v826 = vld [vmem:[%s12 + $0x10] sm:$0xff]
  %v827 = vld [vmem:[%s12 + $0x18] sm:$0xff]
  %v828 = vld [vmem:[%s12 + $0x20] sm:$0xff]
  %v829 = vld [vmem:[%s12 + $0x28] sm:$0xff]
  %v830 = vld [vmem:[%s12 + $0x30] sm:$0xff]
  %v831 = vld [vmem:[%s12 + $0x38] sm:$0xff]
  %v832 = vld [vmem:[%s12 + $0x40] sm:$0xff]
  %v833 = vld [vmem:[%s12 + $0x48] sm:$0xff]
  %v834 = vld [vmem:[%s12 + $0x50] sm:$0xff]
  %v835 = vld [vmem:[%s12 + $0x58] sm:$0xff]
  %v836 = vld [vmem:[%s12 + $0x60] sm:$0xff]
  %v837 = vld [vmem:[%s12 + $0x68] sm:$0xff]
  %v838 = vld [vmem:[%s12 + $0x70] sm:$0xff]
  %v839 = vld [vmem:[%s12 + $0x78] sm:$0xff]
  %v840 = vld [vmem:[%s12 + $0x80] sm:$0xff]
  %v841 = vld [vmem:[%s12 + $0x88] sm:$0xff]
  %v842 = vld [vmem:[%s12 + $0x90] sm:$0xff]
  %v843 = vld [vmem:[%s12 + $0x98] sm:$0xff]
  %v844 = vld [vmem:[%s12 + $0xa0] sm:$0xff]
  %v845 = vld [vmem:[%s12 + $0xa8] sm:$0xff]
  %v846 = vld [vmem:[%s12 + $0xb0] sm:$0xff]
  %v847 = vld [vmem:[%s12 + $0xb8] sm:$0xff]
  %v848 = vld [vmem:[%s12 + $0xc0] sm:$0xff]
  %v849 = vld [vmem:[%s12 + $0xc8] sm:$0xff]
  %v850 = vld [vmem:[%s12 + $0xd0] sm:$0xff]
  %v851 = vld [vmem:[%s12 + $0xd8] sm:$0xff]
  %v852 = vld [vmem:[%s12 + $0xe0] sm:$0xff]
  %v853 = vld [vmem:[%s12 + $0xe8] sm:$0xff]
  %v854 = vld [vmem:[%s12 + $0xf0] sm:$0xff]
  %v855 = vld [vmem:[%s12 + $0xf8] sm:$0xff]
  %v856 = vld [vmem:[%s12 + $0x100] sm:$0xff]
  %v857 = vld [vmem:[%s12 + $0x108] sm:$0xff]
  %v858 = vld [vmem:[%s12 + $0x110] sm:$0xff]
  %v859 = vld [vmem:[%s12 + $0x118] sm:$0xff]
  %v860 = vld [vmem:[%s12 + $0x120] sm:$0xff]
  %v861 = vld [vmem:[%s12 + $0x128] sm:$0xff]
  %v862 = vld [vmem:[%s12 + $0x130] sm:$0xff]
  %v863 = vld [vmem:[%s12 + $0x138] sm:$0xff]
  %v864 = vld [vmem:[%s12 + $0x140] sm:$0xff]
  %v865 = vld [vmem:[%s12 + $0x148] sm:$0xff]
  %v866 = vld [vmem:[%s12 + $0x150] sm:$0xff]
  %v867 = vld [vmem:[%s12 + $0x158] sm:$0xff]
  %v868 = vld [vmem:[%s12 + $0x160] sm:$0xff]
  %v869 = vld [vmem:[%s12 + $0x168] sm:$0xff]
  %v870 = vld [vmem:[%s12 + $0x170] sm:$0xff]
  %v871 = vld [vmem:[%s12 + $0x178] sm:$0xff]
  %v872 = vld [vmem:[%s12 + $0x180] sm:$0xff]
  %v873 = vld [vmem:[%s12 + $0x188] sm:$0xff]
  %v874 = vld [vmem:[%s12 + $0x190] sm:$0xff]
  %v875 = vld [vmem:[%s12 + $0x198] sm:$0xff]
  %v876 = vld [vmem:[%s12 + $0x1a0] sm:$0xff]
  %v877 = vld [vmem:[%s12 + $0x1a8] sm:$0xff]
  %v878 = vld [vmem:[%s12 + $0x1b0] sm:$0xff]
  %v879 = vld [vmem:[%s12 + $0x1b8] sm:$0xff]
  %v880 = vld [vmem:[%s12 + $0x1c0] sm:$0xff]
  %v881 = vld [vmem:[%s12 + $0x1c8] sm:$0xff]
  %v882 = vld [vmem:[%s12 + $0x1d0] sm:$0xff]
  %v883 = vld [vmem:[%s12 + $0x1d8] sm:$0xff]
  %v884 = vld [vmem:[%s12 + $0x1e0] sm:$0xff]
  %v885 = vld [vmem:[%s12 + $0x1e8] sm:$0xff]
  %v886 = vld [vmem:[%s12 + $0x1f0] sm:$0xff]
  %v887 = vld [vmem:[%s12 + $0x1f8] sm:$0xff]
  %v888 = vld [vmem:[%s12 + $0x200] sm:$0xff]
  %v889 = vld [vmem:[%s12 + $0x208] sm:$0xff]
  %v890 = vld [vmem:[%s12 + $0x210] sm:$0xff]
  %v891 = vld [vmem:[%s12 + $0x218] sm:$0xff]
  %v892 = vld [vmem:[%s12 + $0x220] sm:$0xff]
  %v893 = vld [vmem:[%s12 + $0x228] sm:$0xff]
  %v894 = vld [vmem:[%s12 + $0x230] sm:$0xff]
  %v895 = vld [vmem:[%s12 + $0x238] sm:$0xff]
  %v896 = vld [vmem:[%s12 + $0x240] sm:$0xff]
  %v897 = vld [vmem:[%s12 + $0x248] sm:$0xff]
  %v898 = vld [vmem:[%s12 + $0x250] sm:$0xff]
  %v899 = vld [vmem:[%s12 + $0x258] sm:$0xff]
  %v900 = vld [vmem:[%s12 + $0x260] sm:$0xff]
  %v901 = vld [vmem:[%s12 + $0x268] sm:$0xff]
  %v902 = vld [vmem:[%s12 + $0x270] sm:$0xff]
  %v903 = vld [vmem:[%s12 + $0x278] sm:$0xff]
  %v904 = vld [vmem:[%s12 + $0x280] sm:$0xff]
  %v905 = vld [vmem:[%s12 + $0x288] sm:$0xff]
  %v906 = vld [vmem:[%s12 + $0x290] sm:$0xff]
  %v907 = vld [vmem:[%s12 + $0x298] sm:$0xff]
  %v908 = vld [vmem:[%s12 + $0x2a0] sm:$0xff]
  %v909 = vld [vmem:[%s12 + $0x2a8] sm:$0xff]
  %v910 = vld [vmem:[%s12 + $0x2b0] sm:$0xff]
  %v911 = vld [vmem:[%s12 + $0x2b8] sm:$0xff]
  %v912 = vld [vmem:[%s12 + $0x2c0] sm:$0xff]
  %v913 = vld [vmem:[%s12 + $0x2c8] sm:$0xff]
  %v914 = vld [vmem:[%s12 + $0x2d0] sm:$0xff]
  %v915 = vld [vmem:[%s12 + $0x2d8] sm:$0xff]
  %v916 = vld [vmem:[%s12 + $0x2e0] sm:$0xff]
  %v917 = vld [vmem:[%s12 + $0x2e8] sm:$0xff]
  %v918 = vld [vmem:[%s12 + $0x2f0] sm:$0xff]
  %v919 = vld [vmem:[%s12 + $0x2f8] sm:$0xff]
  %v920 = vld [vmem:[%s12 + $0x300] sm:$0xff]
  %v921 = vld [vmem:[%s12 + $0x308] sm:$0xff]
  %v922 = vld [vmem:[%s12 + $0x310] sm:$0xff]
  %v923 = vld [vmem:[%s12 + $0x318] sm:$0xff]
  %v924 = vld [vmem:[%s12 + $0x320] sm:$0xff]
  %v925 = vld [vmem:[%s12 + $0x328] sm:$0xff]
  %v926 = vld [vmem:[%s12 + $0x330] sm:$0xff]
  %v927 = vld [vmem:[%s12 + $0x338] sm:$0xff]
  %v928 = vld [vmem:[%s12 + $0x340] sm:$0xff]
  %v929 = vld [vmem:[%s12 + $0x348] sm:$0xff]
  %v930 = vld [vmem:[%s12 + $0x350] sm:$0xff]
  %v931 = vld [vmem:[%s12 + $0x358] sm:$0xff]
  %v932 = vld [vmem:[%s12 + $0x360] sm:$0xff]
  %v933 = vld [vmem:[%s12 + $0x368] sm:$0xff]
  %v934 = vld [vmem:[%s12 + $0x370] sm:$0xff]
  %v935 = vld [vmem:[%s12 + $0x378] sm:$0xff]
  %v936 = vld [vmem:[%s13] sm:$0xff]
  %v938 = vlaneseq
  %v939 = vshrl.u32 %v938, 7
  %v940 = vsub.s32 0, %v939
  %v941 = vrot.slane %v936, %v940
  %v942 = vlaneseq
  %v943 = vshrl.u32 %v942, 7
  %v944 = vsub.s32 1, %v943
  %v945 = vrot.slane %v936, %v944
  %v946 = vlaneseq
  %v947 = vshrl.u32 %v946, 7
  %v948 = vsub.s32 2, %v947
  %v949 = vrot.slane %v936, %v948
  %v950 = vlaneseq
  %v951 = vshrl.u32 %v950, 7
  %v952 = vsub.s32 3, %v951
  %v953 = vrot.slane %v936, %v952
  %v954 = vlaneseq
  %v955 = vshrl.u32 %v954, 7
  %v956 = vsub.s32 4, %v955
  %v957 = vrot.slane %v936, %v956
  %v958 = vlaneseq
  %v959 = vshrl.u32 %v958, 7
  %v960 = vsub.s32 5, %v959
  %v961 = vrot.slane %v936, %v960
  %v962 = vlaneseq
  %v963 = vshrl.u32 %v962, 7
  %v964 = vsub.s32 6, %v963
  %v965 = vrot.slane %v936, %v964
  %973 = vmatprep.subr.mxu0 %v825
  %974 = vmatpush1.msra.mxu0 %v824
  %975 = vmatprep.subr.mxu0 %v832
  %976 = vmatpush1.msra.mxu0 %v831
  %977 = vmatprep.subr.mxu0 %v839
  %978 = vmatpush1.msra.mxu0 %v838
  %979 = vmatprep.subr.mxu0 %v846
  %980 = vmatpush1.msra.mxu0 %v845
  %981 = vmatprep.subr.mxu0 %v853
  %982 = vmatpush1.msra.mxu0 %v852
  %983 = vmatprep.subr.mxu0 %v860
  %984 = vmatpush1.msra.mxu0 %v859
  %985 = vmatprep.subr.mxu0 %v867
  %986 = vmatpush1.msra.mxu0 %v866
  %987 = vmatprep.subr.mxu0 %v874
  %988 = vmatpush1.msra.mxu0 %v873
  %989 = vmatprep.subr.mxu0 %v881
  %990 = vmatpush1.msra.mxu0 %v880
  %991 = vmatprep.subr.mxu0 %v888
  %992 = vmatpush1.msra.mxu0 %v887
  %993 = vmatprep.subr.mxu0 %v895
  %994 = vmatpush1.msra.mxu0 %v894
  %995 = vmatprep.subr.mxu0 %v902
  %996 = vmatpush1.msra.mxu0 %v901
  %997 = vmatprep.subr.mxu0 %v909
  %998 = vmatpush1.msra.mxu0 %v908
  %999 = vmatprep.subr.mxu0 %v916
  %1000 = vmatpush1.msra.mxu0 %v915
  %1001 = vmatprep.subr.mxu0 %v923
  %1002 = vmatpush1.msra.mxu0 %v922
  %1003 = vmatprep.subr.mxu0 %v930
  %1004 = vmatpush1.msra.mxu0 %v929
  %1005 = vmatprep.subr.mxu0 0.0
  %1006 = vmatpush1.msra.mxu0 0.0
  %1007 = vmatprep.subr.mxu0 0.0
  %1008 = vmatpush1.msra.mxu0 0.0
  %1009 = vmatprep.subr.mxu0 0.0
  %1010 = vmatpush1.msra.mxu0 0.0
  %1011 = vmatprep.subr.mxu0 0.0
  %1012 = vmatpush1.msra.mxu0 0.0
  %1013 = vmatprep.subr.mxu0 0.0
  %1014 = vmatpush1.msra.mxu0 0.0
  %1015 = vmatprep.subr.mxu0 0.0
  %1016 = vmatpush1.msra.mxu0 0.0
  %1017 = vmatprep.subr.mxu0 0.0
  %1018 = vmatpush1.msra.mxu0 0.0
  %1019 = vmatprep.subr.mxu0 0.0
  %1020 = vmatpush1.msra.mxu0 0.0
  %1021 = vmatprep.subr.mxu0 0.0
  %1022 = vmatpush1.msra.mxu0 0.0
  %1023 = vmatprep.subr.mxu0 0.0
  %1024 = vmatpush1.msra.mxu0 0.0
  %1025 = vmatprep.subr.mxu0 0.0
  %1026 = vmatpush1.msra.mxu0 0.0
  %1027 = vmatprep.subr.mxu0 0.0
  %1028 = vmatpush1.msra.mxu0 0.0
  %1029 = vmatprep.subr.mxu0 0.0
  %1030 = vmatpush1.msra.mxu0 0.0
  %1031 = vmatprep.subr.mxu0 0.0
  %1032 = vmatpush1.msra.mxu0 0.0
  %1033 = vmatprep.subr.mxu0 0.0
  %1034 = vmatpush1.msra.mxu0 0.0
  %1035 = vmatprep.subr.mxu0 0.0
  %1036 = vmatpush1.msra.mxu0 0.0
  %1037 = vmatprep.mubr.f32.mxu0 0.0
  %1038 = vmatmul.mubr.f32.gmra.mrb[0].mxu0 %v823
  %v1039 = vpop.f32.mrb[0].mxu0
  %v1040 = vadd.f32 %v941, %v1039
  %v1041 = vpop.f32.mrb[0].mxu0
  %v1042 = vadd.f32 %v945, %v1041
  %1043 = vdwg.mxu0
  %1044 = vmatprep.subr.mxu0 %v827
  %1045 = vmatpush1.msra.mxu0 %v826
  %1046 = vmatprep.subr.mxu0 %v834
  %1047 = vmatpush1.msra.mxu0 %v833
  %1048 = vmatprep.subr.mxu0 %v841
  %1049 = vmatpush1.msra.mxu0 %v840
  %1050 = vmatprep.subr.mxu0 %v848
  %1051 = vmatpush1.msra.mxu0 %v847
  %1052 = vmatprep.subr.mxu0 %v855
  %1053 = vmatpush1.msra.mxu0 %v854
  %1054 = vmatprep.subr.mxu0 %v862
  %1055 = vmatpush1.msra.mxu0 %v861
  %1056 = vmatprep.subr.mxu0 %v869
  %1057 = vmatpush1.msra.mxu0 %v868
  %1058 = vmatprep.subr.mxu0 %v876
  %1059 = vmatpush1.msra.mxu0 %v875
  %1060 = vmatprep.subr.mxu0 %v883
  %1061 = vmatpush1.msra.mxu0 %v882
  %1062 = vmatprep.subr.mxu0 %v890
  %1063 = vmatpush1.msra.mxu0 %v889
  %1064 = vmatprep.subr.mxu0 %v897
  %1065 = vmatpush1.msra.mxu0 %v896
  %1066 = vmatprep.subr.mxu0 %v904
  %1067 = vmatpush1.msra.mxu0 %v903
  %1068 = vmatprep.subr.mxu0 %v911
  %1069 = vmatpush1.msra.mxu0 %v910
  %1070 = vmatprep.subr.mxu0 %v918
  %1071 = vmatpush1.msra.mxu0 %v917
  %1072 = vmatprep.subr.mxu0 %v925
  %1073 = vmatpush1.msra.mxu0 %v924
  %1074 = vmatprep.subr.mxu0 %v932
  %1075 = vmatpush1.msra.mxu0 %v931
  %1076 = vmatprep.subr.mxu0 0.0
  %1077 = vmatpush1.msra.mxu0 0.0
  %1078 = vmatprep.subr.mxu0 0.0
  %1079 = vmatpush1.msra.mxu0 0.0
  %1080 = vmatprep.subr.mxu0 0.0
  %1081 = vmatpush1.msra.mxu0 0.0
  %1082 = vmatprep.subr.mxu0 0.0
  %1083 = vmatpush1.msra.mxu0 0.0
  %1084 = vmatprep.subr.mxu0 0.0
  %1085 = vmatpush1.msra.mxu0 0.0
  %1086 = vmatprep.subr.mxu0 0.0
  %1087 = vmatpush1.msra.mxu0 0.0
  %1088 = vmatprep.subr.mxu0 0.0
  %1089 = vmatpush1.msra.mxu0 0.0
  %1090 = vmatprep.subr.mxu0 0.0
  %1091 = vmatpush1.msra.mxu0 0.0
  %1092 = vmatprep.subr.mxu0 0.0
  %1093 = vmatpush1.msra.mxu0 0.0
  %1094 = vmatprep.subr.mxu0 0.0
  %1095 = vmatpush1.msra.mxu0 0.0
  %1096 = vmatprep.subr.mxu0 0.0
  %1097 = vmatpush1.msra.mxu0 0.0
  %1098 = vmatprep.subr.mxu0 0.0
  %1099 = vmatpush1.msra.mxu0 0.0
  %1100 = vmatprep.subr.mxu0 0.0
  %1101 = vmatpush1.msra.mxu0 0.0
  %1102 = vmatprep.subr.mxu0 0.0
  %1103 = vmatpush1.msra.mxu0 0.0
  %1104 = vmatprep.subr.mxu0 0.0
  %1105 = vmatpush1.msra.mxu0 0.0
  %1106 = vmatprep.subr.mxu0 0.0
  %1107 = vmatpush1.msra.mxu0 0.0
  %1108 = vmatprep.mubr.f32.mxu0 0.0
  %1109 = vmatmul.mubr.f32.gmra.mrb[0].mxu0 %v823
  %v1110 = vpop.f32.mrb[0].mxu0
  %v1111 = vadd.f32 %v949, %v1110
  %v1112 = vpop.f32.mrb[0].mxu0
  %v1113 = vadd.f32 %v953, %v1112
  %1114 = vdwg.mxu0
  %1115 = vmatprep.subr.mxu0 %v829
  %1116 = vmatpush1.msra.mxu0 %v828
  %1117 = vmatprep.subr.mxu0 %v836
  %1118 = vmatpush1.msra.mxu0 %v835
  %1119 = vmatprep.subr.mxu0 %v843
  %1120 = vmatpush1.msra.mxu0 %v842
  %1121 = vmatprep.subr.mxu0 %v850
  %1122 = vmatpush1.msra.mxu0 %v849
  %1123 = vmatprep.subr.mxu0 %v857
  %1124 = vmatpush1.msra.mxu0 %v856
  %1125 = vmatprep.subr.mxu0 %v864
  %1126 = vmatpush1.msra.mxu0 %v863
  %1127 = vmatprep.subr.mxu0 %v871
  %1128 = vmatpush1.msra.mxu0 %v870
  %1129 = vmatprep.subr.mxu0 %v878
  %1130 = vmatpush1.msra.mxu0 %v877
  %1131 = vmatprep.subr.mxu0 %v885
  %1132 = vmatpush1.msra.mxu0 %v884
  %1133 = vmatprep.subr.mxu0 %v892
  %1134 = vmatpush1.msra.mxu0 %v891
  %1135 = vmatprep.subr.mxu0 %v899
  %1136 = vmatpush1.msra.mxu0 %v898
  %1137 = vmatprep.subr.mxu0 %v906
  %1138 = vmatpush1.msra.mxu0 %v905
  %1139 = vmatprep.subr.mxu0 %v913
  %1140 = vmatpush1.msra.mxu0 %v912
  %1141 = vmatprep.subr.mxu0 %v920
  %1142 = vmatpush1.msra.mxu0 %v919
  %1143 = vmatprep.subr.mxu0 %v927
  %1144 = vmatpush1.msra.mxu0 %v926
  %1145 = vmatprep.subr.mxu0 %v934
  %1146 = vmatpush1.msra.mxu0 %v933
  %1147 = vmatprep.subr.mxu0 0.0
  %1148 = vmatpush1.msra.mxu0 0.0
  %1149 = vmatprep.subr.mxu0 0.0
  %1150 = vmatpush1.msra.mxu0 0.0
  %1151 = vmatprep.subr.mxu0 0.0
  %1152 = vmatpush1.msra.mxu0 0.0
  %1153 = vmatprep.subr.mxu0 0.0
  %1154 = vmatpush1.msra.mxu0 0.0
  %1155 = vmatprep.subr.mxu0 0.0
  %1156 = vmatpush1.msra.mxu0 0.0
  %1157 = vmatprep.subr.mxu0 0.0
  %1158 = vmatpush1.msra.mxu0 0.0
  %1159 = vmatprep.subr.mxu0 0.0
  %1160 = vmatpush1.msra.mxu0 0.0
  %1161 = vmatprep.subr.mxu0 0.0
  %1162 = vmatpush1.msra.mxu0 0.0
  %1163 = vmatprep.subr.mxu0 0.0
  %1164 = vmatpush1.msra.mxu0 0.0
  %1165 = vmatprep.subr.mxu0 0.0
  %1166 = vmatpush1.msra.mxu0 0.0
  %1167 = vmatprep.subr.mxu0 0.0
  %1168 = vmatpush1.msra.mxu0 0.0
  %1169 = vmatprep.subr.mxu0 0.0
  %1170 = vmatpush1.msra.mxu0 0.0
  %1171 = vmatprep.subr.mxu0 0.0
  %1172 = vmatpush1.msra.mxu0 0.0
  %1173 = vmatprep.subr.mxu0 0.0
  %1174 = vmatpush1.msra.mxu0 0.0
  %1175 = vmatprep.subr.mxu0 0.0
  %1176 = vmatpush1.msra.mxu0 0.0
  %1177 = vmatprep.subr.mxu0 0.0
  %1178 = vmatpush1.msra.mxu0 0.0
  %1179 = vmatprep.mubr.f32.mxu0 0.0
  %1180 = vmatmul.mubr.f32.gmra.mrb[0].mxu0 %v823
  %v1181 = vpop.f32.mrb[0].mxu0
  %v1182 = vadd.f32 %v957, %v1181
  %v1183 = vpop.f32.mrb[0].mxu0
  %v1184 = vadd.f32 %v961, %v1183
  %1185 = vdwg.mxu0
  %1186 = vmatprep.subr.mxu0 0.0
  %1187 = vmatpush1.msra.mxu0 %v830
  %1188 = vmatprep.subr.mxu0 0.0
  %1189 = vmatpush1.msra.mxu0 %v837
  %1190 = vmatprep.subr.mxu0 0.0
  %1191 = vmatpush1.msra.mxu0 %v844
  %1192 = vmatprep.subr.mxu0 0.0
  %1193 = vmatpush1.msra.mxu0 %v851
  %1194 = vmatprep.subr.mxu0 0.0
  %1195 = vmatpush1.msra.mxu0 %v858
  %1196 = vmatprep.subr.mxu0 0.0
  %1197 = vmatpush1.msra.mxu0 %v865
  %1198 = vmatprep.subr.mxu0 0.0
  %1199 = vmatpush1.msra.mxu0 %v872
  %1200 = vmatprep.subr.mxu0 0.0
  %1201 = vmatpush1.msra.mxu0 %v879
  %1202 = vmatprep.subr.mxu0 0.0
  %1203 = vmatpush1.msra.mxu0 %v886
  %1204 = vmatprep.subr.mxu0 0.0
  %1205 = vmatpush1.msra.mxu0 %v893
  %1206 = vmatprep.subr.mxu0 0.0
  %1207 = vmatpush1.msra.mxu0 %v900
  %1208 = vmatprep.subr.mxu0 0.0
  %1209 = vmatpush1.msra.mxu0 %v907
  %1210 = vmatprep.subr.mxu0 0.0
  %1211 = vmatpush1.msra.mxu0 %v914
  %1212 = vmatprep.subr.mxu0 0.0
  %1213 = vmatpush1.msra.mxu0 %v921
  %1214 = vmatprep.subr.mxu0 0.0
  %1215 = vmatpush1.msra.mxu0 %v928
  %1216 = vmatprep.subr.mxu0 0.0
  %1217 = vmatpush1.msra.mxu0 %v935
  %1218 = vmatprep.subr.mxu0 0.0
  %1219 = vmatpush1.msra.mxu0 0.0
  %1220 = vmatprep.subr.mxu0 0.0
  %1221 = vmatpush1.msra.mxu0 0.0
  %1222 = vmatprep.subr.mxu0 0.0
  %1223 = vmatpush1.msra.mxu0 0.0
  %1224 = vmatprep.subr.mxu0 0.0
  %1225 = vmatpush1.msra.mxu0 0.0
  %1226 = vmatprep.subr.mxu0 0.0
  %1227 = vmatpush1.msra.mxu0 0.0
  %1228 = vmatprep.subr.mxu0 0.0
  %1229 = vmatpush1.msra.mxu0 0.0
  %1230 = vmatprep.subr.mxu0 0.0
  %1231 = vmatpush1.msra.mxu0 0.0
  %1232 = vmatprep.subr.mxu0 0.0
  %1233 = vmatpush1.msra.mxu0 0.0
  %1234 = vmatprep.subr.mxu0 0.0
  %1235 = vmatpush1.msra.mxu0 0.0
  %1236 = vmatprep.subr.mxu0 0.0
  %1237 = vmatpush1.msra.mxu0 0.0
  %1238 = vmatprep.subr.mxu0 0.0
  %1239 = vmatpush1.msra.mxu0 0.0
  %1240 = vmatprep.subr.mxu0 0.0
  %1241 = vmatpush1.msra.mxu0 0.0
  %1242 = vmatprep.subr.mxu0 0.0
  %1243 = vmatpush1.msra.mxu0 0.0
  %1244 = vmatprep.subr.mxu0 0.0
  %1245 = vmatpush1.msra.mxu0 0.0
  %1246 = vmatprep.subr.mxu0 0.0
  %1247 = vmatpush1.msra.mxu0 0.0
  %1248 = vmatprep.subr.mxu0 0.0
  %1249 = vmatpush1.msra.mxu0 0.0
  %1250 = vmatprep.mubr.f32.mxu0 0.0
  %1251 = vmatmul.mubr.f32.gmra.mrb[0].mxu0 %v823
  %v1252 = vpop.f32.mrb[0].mxu0
  %v1253 = vadd.f32 %v965, %v1252
  %v1254 = vpop.f32.mrb[0].mxu0
  %1255 = vdwg.mxu0
  %v1256 = vxor.u32 %v1040, 2147483648
  %v1257 = vxor.u32 %v1042, 2147483648
  %v1258 = vxor.u32 %v1111, 2147483648
  %v1259 = vxor.u32 %v1113, 2147483648
  %v1260 = vxor.u32 %v1182, 2147483648
  %v1261 = vxor.u32 %v1184, 2147483648
  %v1262 = vxor.u32 %v1253, 2147483648
  %v1263 = vmul.f32 %v1256, 1.442695
  %v1264 = vpow.pop %v1263
  %v1265 = vmul.f32 %v1257, 1.442695
  %v1266 = vpow.pop %v1265
  %v1267 = vmul.f32 %v1258, 1.442695
  %v1268 = vpow.pop %v1267
  %v1269 = vmul.f32 %v1259, 1.442695
  %v1270 = vpow.pop %v1269
  %v1271 = vmul.f32 %v1260, 1.442695
  %v1272 = vpow.pop %v1271
  %v1273 = vmul.f32 %v1261, 1.442695
  %v1274 = vpow.pop %v1273
  %v1275 = vmul.f32 %v1262, 1.442695
  %v1276 = vpow.pop %v1275
  %v1277 = vadd.f32 %v1264, 1.0
  %v1278 = vadd.f32 %v1266, 1.0
  %v1279 = vadd.f32 %v1268, 1.0
  %v1280 = vadd.f32 %v1270, 1.0
  %v1281 = vadd.f32 %v1272, 1.0
  %v1282 = vadd.f32 %v1274, 1.0
  %v1283 = vadd.f32 %v1276, 1.0
  %v1284 = vrcp.pop %v1277
  %v1285 = vmul.f32 1.0, %v1284
  %v1286 = vrcp.pop %v1278
  %v1287 = vmul.f32 1.0, %v1286
  %v1288 = vrcp.pop %v1279
  %v1289 = vmul.f32 1.0, %v1288
  %v1290 = vrcp.pop %v1280
  %v1291 = vmul.f32 1.0, %v1290
  %v1292 = vrcp.pop %v1281
  %v1293 = vmul.f32 1.0, %v1292
  %v1294 = vrcp.pop %v1282
  %v1295 = vmul.f32 1.0, %v1294
  %v1296 = vrcp.pop %v1283
  %v1297 = vmul.f32 1.0, %v1296
  %1298 = vst [vmem:[%s14] sm:$0xff] %v1285
  %1299 = vst [vmem:[%s14 + $0x8] sm:$0xff] %v1287
  %1300 = vst [vmem:[%s14 + $0x10] sm:$0xff] %v1289
  %1301 = vst [vmem:[%s14 + $0x18] sm:$0xff] %v1291
  %1302 = vst [vmem:[%s14 + $0x20] sm:$0xff] %v1293
  %1303 = vst [vmem:[%s14 + $0x28] sm:$0xff] %v1295
  %1304 = vst [vmem:[%s14 + $0x30] sm:$0xff] %v1297
  // Predicated region
  $region58: #{vae_forward.1} parent=0 // pred_check
    _
  $region59: #{vae_forward.1} parent=0 // pred_check_branch
    %1306 = sbr.rel (0) target = $region61
  $region60: #{vae_forward.1} parent=0 // pred_region
    _
  $region61: #{vae_forward.1} parent=0 // pred_fallthru
    _
  // Predicated region
  $region62: #{vae_forward.1} parent=0 // pred_check
    _
  $region63: #{vae_forward.1} parent=0 // pred_check_branch
    %1308 = sbr.rel (0) target = $region65
  $region64: #{vae_forward.1} parent=0 // pred_region
    _
  $region65: #{vae_forward.1} parent=0 // pred_fallthru
    _
  // Predicated region
  $region66: #{vae_forward.1} parent=0 // pred_check
    _
  $region67: #{vae_forward.1} parent=0 // pred_check_branch
    %1310 = sbr.rel (0) target = $region69
  $region68: #{vae_forward.1} parent=0 // pred_region
    _
  $region69: #{vae_forward.1} parent=0 // pred_fallthru
    _
  // Predicated region
  $region70: #{vae_forward.1} parent=0 // pred_check
    _
  $region71: #{vae_forward.1} parent=0 // pred_check_branch
    %1312 = sbr.rel (0) target = $region73
  $region72: #{vae_forward.1} parent=0 // pred_region
    _
  $region73: #{vae_forward.1} parent=0 // pred_fallthru
    _

</llo_original>
